<compile_context>
chip_gen: v6e
topology: v6e:2x2x1
jax: 0.10.0
libtpu: 0.0.40
codegen_flags: <defaults>
</compile_context>

<pallas_src>
import jax
import jax.numpy as jnp
from jax import lax
from jax.experimental import pallas as pl
from jax.experimental.pallas import tpu as pltpu


def _round_up(x, m):
    return ((x + m - 1) // m) * m


def _tpu_generation():
    """Best-effort TPU generation sniff; falls back to 'unknown' safely."""
    try:
        kind = jax.devices()[0].device_kind.lower()
    except Exception:  # pragma: no cover - defensive
        return "unknown"
    if "v5 lite" in kind or "v5e" in kind or "v5lite" in kind:
        return "v5e"
    if "v6" in kind:
        return "v6e"
    if "v7" in kind or "7x" in kind:
        return "v7x"
    return "unknown"


def _make_kernel(b_tile, t_tile, t_total, unroll, needs_mask):
    """Builds the kernel for fixed static sizes (closed over)."""
    two_b = 2 * b_tile

    def kernel(x_ref, wih_ref, whh_ref, bias_ref, wd1_ref, wd2_ref, bd_ref,
               out_ref, h1_scr, h2_scr):
        # x_ref:   [t_tile*2*b_tile, D]   rows ordered (t, pair, batch)
        # wih_ref: [D, Hp]   whh_ref: [Hp, Hp]   bias_ref: [1, Hp]
        # wd1/wd2: [1, Hp]   bd_ref: [1, 1]      out_ref: [b_tile, 1]
        # h1_scr/h2_scr: VMEM [b_tile, Hp] per-chain hidden state, carried
        #                across T chunks.
        t_idx = pl.program_id(1)

        # Hoist weight / bias loads (and the bias broadcast) out of the loop.
        wih = wih_ref[...]
        whh = whh_ref[...]
        bias_b = jnp.broadcast_to(bias_ref[...],
                                  (two_b,) + bias_ref.shape[1:])

        @pl.when(t_idx == 0)
        def _init():
            h1_scr[...] = jnp.zeros_like(h1_scr)
            h2_scr[...] = jnp.zeros_like(h2_scr)

        def step(t, carry):
            h1, h2 = carry
            off = pl.multiple_of(t * two_b, two_b)
            # Per-step input projection (fused over both chains).  Independent
            # of h, so under the unrolled loop the MXU does it while the
            # previous step's tanh runs on the EUP.
            x_t = x_ref[pl.ds(off, two_b), :]                    # [2B, D]
            p = jnp.dot(x_t, wih,
                        preferred_element_type=jnp.float32) + bias_b
            p1 = p[:b_tile]
            p2 = p[b_tile:]
            # Two independent half-chains: dot(h1) / tanh(h2) can overlap.
            h1n = jnp.tanh(
                p1 + jnp.dot(h1, whh, preferred_element_type=jnp.float32))
            h2n = jnp.tanh(
                p2 + jnp.dot(h2, whh, preferred_element_type=jnp.float32))
            if needs_mask:
                valid = (t_idx * t_tile + t) < t_total
                h1n = jnp.where(valid, h1n, h1)
                h2n = jnp.where(valid, h2n, h2)
            return (h1n, h2n)

        h1, h2 = lax.fori_loop(0, t_tile, step,
                               (h1_scr[...], h2_scr[...]), unroll=unroll)
        h1_scr[...] = h1
        h2_scr[...] = h2

        @pl.when(t_idx == pl.num_programs(1) - 1)
        def _final():
            # dense([h1, h2]) as a VPU multiply + lane reduction (no N=1 MXU
            # matmul); uses the loop-carried values, no scratch reload.
            logit = (jnp.sum(h1 * wd1_ref[...] + h2 * wd2_ref[...],
                             axis=-1, keepdims=True)
                     + bd_ref[...])
            out_ref[...] = jax.nn.sigmoid(logit)

    return kernel


def rnn_pair_classifier_forward(batch, params, *, b_tile=None, t_tile=None):
    """batch: [B, 2, T, D] float32 -> [B, 1] sigmoid prediction."""
    B, two, T, D = batch.shape
    assert two == 2
    H = params["w_ih"].shape[0]
    HP = _round_up(H, 128)                       # lane-aligned hidden size

    gen = _tpu_generation()

    # ---- batch tile (generation aware) ----
    if b_tile is None:
        # v6e/v7x: two_b up to 256 matches the 256-wide MXU and halves the
        # number of serial recurrences; v5e/unknown: keep two_b <= 128.
        b_cap = 128 if gen in ("v6e", "v7x") else 64
        b_tile = min(_round_up(B, 8), b_cap)
        if gen == "v7x" and B > 8:
            # Keep n_bt >= 2 so the 'parallel' batch axis feeds both
            # TensorCores of a v7x chip.
            b_tile = min(b_tile, _round_up(-(-B // 2), 8))
    n_bt = -(-B // b_tile)
    BP = n_bt * b_tile
    two_b = 2 * b_tile

    # ---- VMEM-budget-aware T chunk (and explicit vmem limit) ----
    budget = 32 << 20                            # per-step working-set budget
    bytes_w = 2 * 4 * (D * HP + HP * HP + 3 * HP + 1)   # weights (x2 buffers)
    bytes_h = 4 * (two_b * HP)                          # h1 + h2 scratch
    bytes_fix = bytes_w + bytes_h + 2 * 4 * b_tile      # + tiny output block
    bytes_per_t = 2 * 4 * (two_b * D)                   # x chunk (x2 buffers)
    if t_tile is None:
        t_cap = max(1, min(256, (budget - bytes_fix) // max(bytes_per_t, 1)))
        if T <= t_cap:
            t_tile = T
        else:
            # Prefer a divisor of T (no per-step mask); otherwise pad + mask.
            div = 1
            for cand in range(t_cap, 0, -1):
                if T % cand == 0:
                    div = cand
                    break
            t_tile = div if div >= max(1, t_cap // 2) else t_cap
    n_tt = -(-T // t_tile)
    TP = n_tt * t_tile
    needs_mask = TP != T
    unroll = t_tile if t_tile <= 8 else 8

    vmem_need = bytes_fix + bytes_per_t * t_tile
    vmem_limit = int(min(max(vmem_need + (8 << 20), 48 << 20), 110 << 20))

    # ---- layout glue (plain JAX, outside the kernel) ----
    xb = batch.astype(jnp.float32)
    xb = jnp.pad(xb, ((0, BP - B), (0, 0), (0, TP - T), (0, 0)))
    # [BP, 2, TP, D] -> [n_bt, TP*2*b_tile, D]; rows ordered (t, pair, batch)
    # so each per-step operand is a contiguous 2-D slab (no in-kernel
    # reshape/gather) and each batch tile contains complete pairs.
    xs = xb.reshape(n_bt, b_tile, 2, TP, D)
    xs = jnp.transpose(xs, (0, 3, 2, 1, 4))      # [n_bt, TP, 2, b_tile, D]
    xs = xs.reshape(n_bt, TP * 2 * b_tile, D)

    def pad2(a, shape):
        z = jnp.zeros(shape, jnp.float32)
        return z.at[: a.shape[0], : a.shape[1]].set(a.astype(jnp.float32))

    wih_p = pad2(params["w_ih"].T, (D, HP))                            # [D, Hp]
    whh_p = pad2(params["w_hh"].T, (HP, HP))                           # [Hp, Hp]
    bias_p = pad2((params["b_ih"] + params["b_hh"]).reshape(1, H), (1, HP))
    wd = params["w_dense"]
    wd1_p = pad2(wd[:, :H], (1, HP))                                   # [1, Hp]
    wd2_p = pad2(wd[:, H:], (1, HP))                                   # [1, Hp]
    bd = params["b_dense"].reshape(1, 1).astype(jnp.float32)           # [1, 1]

    kernel = _make_kernel(b_tile, t_tile, T, unroll, needs_mask)

    cost = pl.CostEstimate(
        flops=int(4 * B * T * HP * (D + HP) + 4 * B * HP),
        transcendentals=int(2 * B * T * HP + B),
        bytes_accessed=int(4 * (B * 2 * T * D
                                + D * HP + HP * HP + 3 * HP + 1 + B)),
    )

    out = pl.pallas_call(
        kernel,
        out_shape=jax.ShapeDtypeStruct((BP, 1), jnp.float32),
        grid_spec=pltpu.PrefetchScalarGridSpec(
            num_scalar_prefetch=0,
            grid=(n_bt, n_tt),
            in_specs=[
                pl.BlockSpec((None, t_tile * two_b, D), lambda b, t: (b, t, 0)),
                pl.BlockSpec((D, HP), lambda b, t: (0, 0)),
                pl.BlockSpec((HP, HP), lambda b, t: (0, 0)),
                pl.BlockSpec((1, HP), lambda b, t: (0, 0)),
                pl.BlockSpec((1, HP), lambda b, t: (0, 0)),
                pl.BlockSpec((1, HP), lambda b, t: (0, 0)),
                pl.BlockSpec((1, 1), lambda b, t: (0, 0)),
            ],
            out_specs=pl.BlockSpec((b_tile, 1), lambda b, t: (b, 0)),
            scratch_shapes=[
                pltpu.VMEM((b_tile, HP), jnp.float32),   # h1 (node-1 chain)
                pltpu.VMEM((b_tile, HP), jnp.float32),   # h2 (node-2 chain)
            ],
        ),
        compiler_params=pltpu.CompilerParams(
            dimension_semantics=("parallel", "arbitrary"),
            vmem_limit_bytes=vmem_limit),
        cost_estimate=cost,
    )(xs, wih_p, whh_p, bias_p, wd1_p, wd2_p, bd)
    return out[:B]


def reference_forward(batch, params):
    """Pure-JAX reference mirroring the PyTorch forward (eval mode)."""
    def run_rnn(x):  # x: [B, T, D]
        h = jnp.zeros((x.shape[0], params["w_ih"].shape[0]), jnp.float32)

        def step(h, xt):
            h = jnp.tanh(xt @ params["w_ih"].T + params["b_ih"]
                         + h @ params["w_hh"].T + params["b_hh"])
            return h, None

        h, _ = lax.scan(step, h, jnp.transpose(x, (1, 0, 2)))
        return h  # last-timestep output == last hidden state for 1-layer RNN

    h1 = run_rnn(batch[:, 0])
    h2 = run_rnn(batch[:, 1])
    rep = jnp.concatenate([h1, h2], axis=1)
    return jax.nn.sigmoid(rep @ params["w_dense"].T + params["b_dense"])


def init_params(key, input_size, hidden_size):
    ks = jax.random.split(key, 6)
    scale = 1.0 / jnp.sqrt(hidden_size)
    return {
        "w_ih": jax.random.uniform(ks[0], (hidden_size, input_size),
                                   jnp.float32, -scale, scale),
        "w_hh": jax.random.uniform(ks[1], (hidden_size, hidden_size),
                                   jnp.float32, -scale, scale),
        "b_ih": jax.random.uniform(ks[2], (hidden_size,),
                                   jnp.float32, -scale, scale),
        "b_hh": jax.random.uniform(ks[3], (hidden_size,),
                                   jnp.float32, -scale, scale),
        "w_dense": jax.random.uniform(ks[4], (1, 2 * hidden_size),
                                      jnp.float32, -scale, scale),
        "b_dense": jax.random.uniform(ks[5], (1,),
                                      jnp.float32, -scale, scale),
    }


if __name__ == "__main__":
    B, T, D, H = 2, 8, 16, 32
    key = jax.random.PRNGKey(0)
    k_x, k_p = jax.random.split(key)

    batch = jax.random.normal(k_x, (B, 2, T, D), jnp.float32)
    params = init_params(k_p, input_size=D, hidden_size=H)

    pred = rnn_pair_classifier_forward(batch, params)
    pred = jax.block_until_ready(pred)

    ref = reference_forward(batch, params)
    assert pred.shape == (B, 1)
    assert jnp.allclose(pred, ref, atol=1e-5, rtol=1e-5), (pred, ref)

    print("KERNEL_OK")
</pallas_src>

<mosaic_0001>
module attributes {stable_mosaic.version = 11 : i64} {
  func.func @kernel(%arg0: i32, %arg1: i32, %arg2: memref<1x128x16xf32, #tpu.memory_space<vmem>>, %arg3: memref<16x128xf32, #tpu.memory_space<vmem>>, %arg4: memref<128x128xf32, #tpu.memory_space<vmem>>, %arg5: memref<1x128xf32, #tpu.memory_space<vmem>>, %arg6: memref<1x128xf32, #tpu.memory_space<vmem>>, %arg7: memref<1x128xf32, #tpu.memory_space<vmem>>, %arg8: memref<1x1xf32, #tpu.memory_space<vmem>>, %arg9: memref<8x1xf32, #tpu.memory_space<vmem>>, %arg10: memref<8x128xf32, #tpu.memory_space<vmem>>, %arg11: memref<8x128xf32, #tpu.memory_space<vmem>>) attributes {dimension_semantics = [#tpu.dimension_semantics<parallel>, #tpu.dimension_semantics<arbitrary>], iteration_bounds = array<i64: 1, 1>, scalar_prefetch = 0 : i64, scratch_operands = 2 : i64, tpu.core_type = #tpu.core_type<tc>, window_params = [{transform_indices = @transform_0, window_bounds = array<i64: 1, 128, 16>}, {pipeline_mode = #tpu.pipeline_mode<synchronous>, transform_indices = @transform_1, window_bounds = array<i64: 16, 128>}, {pipeline_mode = #tpu.pipeline_mode<synchronous>, transform_indices = @transform_2, window_bounds = array<i64: 128, 128>}, {pipeline_mode = #tpu.pipeline_mode<synchronous>, transform_indices = @transform_3, window_bounds = array<i64: 1, 128>}, {pipeline_mode = #tpu.pipeline_mode<synchronous>, transform_indices = @transform_4, window_bounds = array<i64: 1, 128>}, {pipeline_mode = #tpu.pipeline_mode<synchronous>, transform_indices = @transform_5, window_bounds = array<i64: 1, 128>}, {pipeline_mode = #tpu.pipeline_mode<synchronous>, transform_indices = @transform_6, window_bounds = array<i64: 1, 1>}, {transform_indices = @transform_7, window_bounds = array<i64: 8, 1>}]} {
    %c0 = arith.constant 0 : index
    %c0_0 = arith.constant 0 : index
    %0 = vector.load %arg3[%c0, %c0_0] : memref<16x128xf32, #tpu.memory_space<vmem>>, vector<16x128xf32>
    %c0_1 = arith.constant 0 : index
    %c0_2 = arith.constant 0 : index
    %1 = vector.load %arg4[%c0_1, %c0_2] : memref<128x128xf32, #tpu.memory_space<vmem>>, vector<128x128xf32>
    %c0_3 = arith.constant 0 : index
    %c0_4 = arith.constant 0 : index
    %2 = vector.load %arg5[%c0_3, %c0_4] : memref<1x128xf32, #tpu.memory_space<vmem>>, vector<1x128xf32>
    %3 = vector.shape_cast %2 : vector<1x128xf32> to vector<1x128xf32>
    %4 = vector.broadcast %3 : vector<1x128xf32> to vector<16x128xf32>
    %c0_i32 = arith.constant 0 : i32
    %5 = arith.cmpi eq, %arg1, %c0_i32 : i32
    %6 = arith.extui %5 : i1 to i32
    %c0_i32_5 = arith.constant 0 : i32
    %7 = arith.cmpi ne, %6, %c0_i32_5 : i32
    scf.if %7 {
      %cst_63 = arith.constant 0.000000e+00 : f32
      %135 = vector.broadcast %cst_63 : f32 to vector<8x128xf32>
      %c0_64 = arith.constant 0 : index
      %c0_65 = arith.constant 0 : index
      %136 = vector.load %arg10[%c0_64, %c0_65] : memref<8x128xf32, #tpu.memory_space<vmem>>, vector<8x128xf32>
      tpu.vector_store %arg10[%c0_64, %c0_65], %135 {strides = array<i32>} : memref<8x128xf32, #tpu.memory_space<vmem>>, vector<8x128xf32>,
      %cst_66 = arith.constant 0.000000e+00 : f32
      %137 = vector.broadcast %cst_66 : f32 to vector<8x128xf32>
      %c0_67 = arith.constant 0 : index
      %c0_68 = arith.constant 0 : index
      %138 = vector.load %arg11[%c0_67, %c0_68] : memref<8x128xf32, #tpu.memory_space<vmem>>, vector<8x128xf32>
      tpu.vector_store %arg11[%c0_67, %c0_68], %137 {strides = array<i32>} : memref<8x128xf32, #tpu.memory_space<vmem>>, vector<8x128xf32>,
    } else {
    }
    %c0_6 = arith.constant 0 : index
    %c0_7 = arith.constant 0 : index
    %8 = vector.load %arg10[%c0_6, %c0_7] : memref<8x128xf32, #tpu.memory_space<vmem>>, vector<8x128xf32>
    %c0_8 = arith.constant 0 : index
    %c0_9 = arith.constant 0 : index
    %9 = vector.load %arg11[%c0_8, %c0_9] : memref<8x128xf32, #tpu.memory_space<vmem>>, vector<8x128xf32>
    %c0_i32_10 = arith.constant 0 : i32
    %c16_i32 = arith.constant 16 : i32
    %10 = arith.muli %c0_i32_10, %c16_i32 : i32
    %11 = tpu.assume_multiple %10, 16 : i32
    %c0_11 = arith.constant 0 : index
    %12 = arith.index_cast %11 : i32 to index
    %c0_12 = arith.constant 0 : index
    %13 = vector.load %arg2[%c0_11, %12, %c0_12] : memref<1x128x16xf32, #tpu.memory_space<vmem>>, vector<1x16x16xf32>
    %14 = vector.shape_cast %13 : vector<1x16x16xf32> to vector<16x16xf32>
    %cst = arith.constant dense<0.000000e+00> : vector<16x128xf32>
    %15 = tpu.matmul %14, %0, %cst {dimension_numbers = #tpu.dot_dimension_numbers<[1], [0], [0], [1], [0, 0, 1, 1], [], []>} : vector<16x16xf32>, vector<16x128xf32>, vector<16x128xf32> -> vector<16x128xf32>
    %16 = arith.addf %15, %4 : vector<16x128xf32>
    %17 = vector.extract_strided_slice %16 {offsets = [0, 0], sizes = [8, 128], strides = [1, 1]} : vector<16x128xf32> to vector<8x128xf32>
    %18 = vector.extract_strided_slice %16 {offsets = [8, 0], sizes = [8, 128], strides = [1, 1]} : vector<16x128xf32> to vector<8x128xf32>
    %cst_13 = arith.constant dense<0.000000e+00> : vector<8x128xf32>
    %19 = tpu.matmul %8, %1, %cst_13 {dimension_numbers = #tpu.dot_dimension_numbers<[1], [0], [0], [1], [0, 0, 1, 1], [], []>} : vector<8x128xf32>, vector<128x128xf32>, vector<8x128xf32> -> vector<8x128xf32>
    %20 = arith.addf %17, %19 : vector<8x128xf32>
    %21 = math.tanh %20 : vector<8x128xf32>
    %cst_14 = arith.constant dense<0.000000e+00> : vector<8x128xf32>
    %22 = tpu.matmul %9, %1, %cst_14 {dimension_numbers = #tpu.dot_dimension_numbers<[1], [0], [0], [1], [0, 0, 1, 1], [], []>} : vector<8x128xf32>, vector<128x128xf32>, vector<8x128xf32> -> vector<8x128xf32>
    %23 = arith.addf %18, %22 : vector<8x128xf32>
    %24 = math.tanh %23 : vector<8x128xf32>
    %c1_i32 = arith.constant 1 : i32
    %c16_i32_15 = arith.constant 16 : i32
    %25 = arith.muli %c1_i32, %c16_i32_15 : i32
    %26 = tpu.assume_multiple %25, 16 : i32
    %c0_16 = arith.constant 0 : index
    %27 = arith.index_cast %26 : i32 to index
    %c0_17 = arith.constant 0 : index
    %28 = vector.load %arg2[%c0_16, %27, %c0_17] : memref<1x128x16xf32, #tpu.memory_space<vmem>>, vector<1x16x16xf32>
    %29 = vector.shape_cast %28 : vector<1x16x16xf32> to vector<16x16xf32>
    %cst_18 = arith.constant dense<0.000000e+00> : vector<16x128xf32>
    %30 = tpu.matmul %29, %0, %cst_18 {dimension_numbers = #tpu.dot_dimension_numbers<[1], [0], [0], [1], [0, 0, 1, 1], [], []>} : vector<16x16xf32>, vector<16x128xf32>, vector<16x128xf32> -> vector<16x128xf32>
    %31 = arith.addf %30, %4 : vector<16x128xf32>
    %32 = vector.extract_strided_slice %31 {offsets = [0, 0], sizes = [8, 128], strides = [1, 1]} : vector<16x128xf32> to vector<8x128xf32>
    %33 = vector.extract_strided_slice %31 {offsets = [8, 0], sizes = [8, 128], strides = [1, 1]} : vector<16x128xf32> to vector<8x128xf32>
    %cst_19 = arith.constant dense<0.000000e+00> : vector<8x128xf32>
    %34 = tpu.matmul %21, %1, %cst_19 {dimension_numbers = #tpu.dot_dimension_numbers<[1], [0], [0], [1], [0, 0, 1, 1], [], []>} : vector<8x128xf32>, vector<128x128xf32>, vector<8x128xf32> -> vector<8x128xf32>
    %35 = arith.addf %32, %34 : vector<8x128xf32>
    %36 = math.tanh %35 : vector<8x128xf32>
    %cst_20 = arith.constant dense<0.000000e+00> : vector<8x128xf32>
    %37 = tpu.matmul %24, %1, %cst_20 {dimension_numbers = #tpu.dot_dimension_numbers<[1], [0], [0], [1], [0, 0, 1, 1], [], []>} : vector<8x128xf32>, vector<128x128xf32>, vector<8x128xf32> -> vector<8x128xf32>
    %38 = arith.addf %33, %37 : vector<8x128xf32>
    %39 = math.tanh %38 : vector<8x128xf32>
    %c2_i32 = arith.constant 2 : i32
    %c16_i32_21 = arith.constant 16 : i32
    %40 = arith.muli %c2_i32, %c16_i32_21 : i32
    %41 = tpu.assume_multiple %40, 16 : i32
    %c0_22 = arith.constant 0 : index
    %42 = arith.index_cast %41 : i32 to index
    %c0_23 = arith.constant 0 : index
    %43 = vector.load %arg2[%c0_22, %42, %c0_23] : memref<1x128x16xf32, #tpu.memory_space<vmem>>, vector<1x16x16xf32>
    %44 = vector.shape_cast %43 : vector<1x16x16xf32> to vector<16x16xf32>
    %cst_24 = arith.constant dense<0.000000e+00> : vector<16x128xf32>
    %45 = tpu.matmul %44, %0, %cst_24 {dimension_numbers = #tpu.dot_dimension_numbers<[1], [0], [0], [1], [0, 0, 1, 1], [], []>} : vector<16x16xf32>, vector<16x128xf32>, vector<16x128xf32> -> vector<16x128xf32>
    %46 = arith.addf %45, %4 : vector<16x128xf32>
    %47 = vector.extract_strided_slice %46 {offsets = [0, 0], sizes = [8, 128], strides = [1, 1]} : vector<16x128xf32> to vector<8x128xf32>
    %48 = vector.extract_strided_slice %46 {offsets = [8, 0], sizes = [8, 128], strides = [1, 1]} : vector<16x128xf32> to vector<8x128xf32>
    %cst_25 = arith.constant dense<0.000000e+00> : vector<8x128xf32>
    %49 = tpu.matmul %36, %1, %cst_25 {dimension_numbers = #tpu.dot_dimension_numbers<[1], [0], [0], [1], [0, 0, 1, 1], [], []>} : vector<8x128xf32>, vector<128x128xf32>, vector<8x128xf32> -> vector<8x128xf32>
    %50 = arith.addf %47, %49 : vector<8x128xf32>
    %51 = math.tanh %50 : vector<8x128xf32>
    %cst_26 = arith.constant dense<0.000000e+00> : vector<8x128xf32>
    %52 = tpu.matmul %39, %1, %cst_26 {dimension_numbers = #tpu.dot_dimension_numbers<[1], [0], [0], [1], [0, 0, 1, 1], [], []>} : vector<8x128xf32>, vector<128x128xf32>, vector<8x128xf32> -> vector<8x128xf32>
    %53 = arith.addf %48, %52 : vector<8x128xf32>
    %54 = math.tanh %53 : vector<8x128xf32>
    %c3_i32 = arith.constant 3 : i32
    %c16_i32_27 = arith.constant 16 : i32
    %55 = arith.muli %c3_i32, %c16_i32_27 : i32
    %56 = tpu.assume_multiple %55, 16 : i32
    %c0_28 = arith.constant 0 : index
    %57 = arith.index_cast %56 : i32 to index
    %c0_29 = arith.constant 0 : index
    %58 = vector.load %arg2[%c0_28, %57, %c0_29] : memref<1x128x16xf32, #tpu.memory_space<vmem>>, vector<1x16x16xf32>
    %59 = vector.shape_cast %58 : vector<1x16x16xf32> to vector<16x16xf32>
    %cst_30 = arith.constant dense<0.000000e+00> : vector<16x128xf32>
    %60 = tpu.matmul %59, %0, %cst_30 {dimension_numbers = #tpu.dot_dimension_numbers<[1], [0], [0], [1], [0, 0, 1, 1], [], []>} : vector<16x16xf32>, vector<16x128xf32>, vector<16x128xf32> -> vector<16x128xf32>
    %61 = arith.addf %60, %4 : vector<16x128xf32>
    %62 = vector.extract_strided_slice %61 {offsets = [0, 0], sizes = [8, 128], strides = [1, 1]} : vector<16x128xf32> to vector<8x128xf32>
    %63 = vector.extract_strided_slice %61 {offsets = [8, 0], sizes = [8, 128], strides = [1, 1]} : vector<16x128xf32> to vector<8x128xf32>
    %cst_31 = arith.constant dense<0.000000e+00> : vector<8x128xf32>
    %64 = tpu.matmul %51, %1, %cst_31 {dimension_numbers = #tpu.dot_dimension_numbers<[1], [0], [0], [1], [0, 0, 1, 1], [], []>} : vector<8x128xf32>, vector<128x128xf32>, vector<8x128xf32> -> vector<8x128xf32>
    %65 = arith.addf %62, %64 : vector<8x128xf32>
    %66 = math.tanh %65 : vector<8x128xf32>
    %cst_32 = arith.constant dense<0.000000e+00> : vector<8x128xf32>
    %67 = tpu.matmul %54, %1, %cst_32 {dimension_numbers = #tpu.dot_dimension_numbers<[1], [0], [0], [1], [0, 0, 1, 1], [], []>} : vector<8x128xf32>, vector<128x128xf32>, vector<8x128xf32> -> vector<8x128xf32>
    %68 = arith.addf %63, %67 : vector<8x128xf32>
    %69 = math.tanh %68 : vector<8x128xf32>
    %c4_i32 = arith.constant 4 : i32
    %c16_i32_33 = arith.constant 16 : i32
    %70 = arith.muli %c4_i32, %c16_i32_33 : i32
    %71 = tpu.assume_multiple %70, 16 : i32
    %c0_34 = arith.constant 0 : index
    %72 = arith.index_cast %71 : i32 to index
    %c0_35 = arith.constant 0 : index
    %73 = vector.load %arg2[%c0_34, %72, %c0_35] : memref<1x128x16xf32, #tpu.memory_space<vmem>>, vector<1x16x16xf32>
    %74 = vector.shape_cast %73 : vector<1x16x16xf32> to vector<16x16xf32>
    %cst_36 = arith.constant dense<0.000000e+00> : vector<16x128xf32>
    %75 = tpu.matmul %74, %0, %cst_36 {dimension_numbers = #tpu.dot_dimension_numbers<[1], [0], [0], [1], [0, 0, 1, 1], [], []>} : vector<16x16xf32>, vector<16x128xf32>, vector<16x128xf32> -> vector<16x128xf32>
    %76 = arith.addf %75, %4 : vector<16x128xf32>
    %77 = vector.extract_strided_slice %76 {offsets = [0, 0], sizes = [8, 128], strides = [1, 1]} : vector<16x128xf32> to vector<8x128xf32>
    %78 = vector.extract_strided_slice %76 {offsets = [8, 0], sizes = [8, 128], strides = [1, 1]} : vector<16x128xf32> to vector<8x128xf32>
    %cst_37 = arith.constant dense<0.000000e+00> : vector<8x128xf32>
    %79 = tpu.matmul %66, %1, %cst_37 {dimension_numbers = #tpu.dot_dimension_numbers<[1], [0], [0], [1], [0, 0, 1, 1], [], []>} : vector<8x128xf32>, vector<128x128xf32>, vector<8x128xf32> -> vector<8x128xf32>
    %80 = arith.addf %77, %79 : vector<8x128xf32>
    %81 = math.tanh %80 : vector<8x128xf32>
    %cst_38 = arith.constant dense<0.000000e+00> : vector<8x128xf32>
    %82 = tpu.matmul %69, %1, %cst_38 {dimension_numbers = #tpu.dot_dimension_numbers<[1], [0], [0], [1], [0, 0, 1, 1], [], []>} : vector<8x128xf32>, vector<128x128xf32>, vector<8x128xf32> -> vector<8x128xf32>
    %83 = arith.addf %78, %82 : vector<8x128xf32>
    %84 = math.tanh %83 : vector<8x128xf32>
    %c5_i32 = arith.constant 5 : i32
    %c16_i32_39 = arith.constant 16 : i32
    %85 = arith.muli %c5_i32, %c16_i32_39 : i32
    %86 = tpu.assume_multiple %85, 16 : i32
    %c0_40 = arith.constant 0 : index
    %87 = arith.index_cast %86 : i32 to index
    %c0_41 = arith.constant 0 : index
    %88 = vector.load %arg2[%c0_40, %87, %c0_41] : memref<1x128x16xf32, #tpu.memory_space<vmem>>, vector<1x16x16xf32>
    %89 = vector.shape_cast %88 : vector<1x16x16xf32> to vector<16x16xf32>
    %cst_42 = arith.constant dense<0.000000e+00> : vector<16x128xf32>
    %90 = tpu.matmul %89, %0, %cst_42 {dimension_numbers = #tpu.dot_dimension_numbers<[1], [0], [0], [1], [0, 0, 1, 1], [], []>} : vector<16x16xf32>, vector<16x128xf32>, vector<16x128xf32> -> vector<16x128xf32>
    %91 = arith.addf %90, %4 : vector<16x128xf32>
    %92 = vector.extract_strided_slice %91 {offsets = [0, 0], sizes = [8, 128], strides = [1, 1]} : vector<16x128xf32> to vector<8x128xf32>
    %93 = vector.extract_strided_slice %91 {offsets = [8, 0], sizes = [8, 128], strides = [1, 1]} : vector<16x128xf32> to vector<8x128xf32>
    %cst_43 = arith.constant dense<0.000000e+00> : vector<8x128xf32>
    %94 = tpu.matmul %81, %1, %cst_43 {dimension_numbers = #tpu.dot_dimension_numbers<[1], [0], [0], [1], [0, 0, 1, 1], [], []>} : vector<8x128xf32>, vector<128x128xf32>, vector<8x128xf32> -> vector<8x128xf32>
    %95 = arith.addf %92, %94 : vector<8x128xf32>
    %96 = math.tanh %95 : vector<8x128xf32>
    %cst_44 = arith.constant dense<0.000000e+00> : vector<8x128xf32>
    %97 = tpu.matmul %84, %1, %cst_44 {dimension_numbers = #tpu.dot_dimension_numbers<[1], [0], [0], [1], [0, 0, 1, 1], [], []>} : vector<8x128xf32>, vector<128x128xf32>, vector<8x128xf32> -> vector<8x128xf32>
    %98 = arith.addf %93, %97 : vector<8x128xf32>
    %99 = math.tanh %98 : vector<8x128xf32>
    %c6_i32 = arith.constant 6 : i32
    %c16_i32_45 = arith.constant 16 : i32
    %100 = arith.muli %c6_i32, %c16_i32_45 : i32
    %101 = tpu.assume_multiple %100, 16 : i32
    %c0_46 = arith.constant 0 : index
    %102 = arith.index_cast %101 : i32 to index
    %c0_47 = arith.constant 0 : index
    %103 = vector.load %arg2[%c0_46, %102, %c0_47] : memref<1x128x16xf32, #tpu.memory_space<vmem>>, vector<1x16x16xf32>
    %104 = vector.shape_cast %103 : vector<1x16x16xf32> to vector<16x16xf32>
    %cst_48 = arith.constant dense<0.000000e+00> : vector<16x128xf32>
    %105 = tpu.matmul %104, %0, %cst_48 {dimension_numbers = #tpu.dot_dimension_numbers<[1], [0], [0], [1], [0, 0, 1, 1], [], []>} : vector<16x16xf32>, vector<16x128xf32>, vector<16x128xf32> -> vector<16x128xf32>
    %106 = arith.addf %105, %4 : vector<16x128xf32>
    %107 = vector.extract_strided_slice %106 {offsets = [0, 0], sizes = [8, 128], strides = [1, 1]} : vector<16x128xf32> to vector<8x128xf32>
    %108 = vector.extract_strided_slice %106 {offsets = [8, 0], sizes = [8, 128], strides = [1, 1]} : vector<16x128xf32> to vector<8x128xf32>
    %cst_49 = arith.constant dense<0.000000e+00> : vector<8x128xf32>
    %109 = tpu.matmul %96, %1, %cst_49 {dimension_numbers = #tpu.dot_dimension_numbers<[1], [0], [0], [1], [0, 0, 1, 1], [], []>} : vector<8x128xf32>, vector<128x128xf32>, vector<8x128xf32> -> vector<8x128xf32>
    %110 = arith.addf %107, %109 : vector<8x128xf32>
    %111 = math.tanh %110 : vector<8x128xf32>
    %cst_50 = arith.constant dense<0.000000e+00> : vector<8x128xf32>
    %112 = tpu.matmul %99, %1, %cst_50 {dimension_numbers = #tpu.dot_dimension_numbers<[1], [0], [0], [1], [0, 0, 1, 1], [], []>} : vector<8x128xf32>, vector<128x128xf32>, vector<8x128xf32> -> vector<8x128xf32>
    %113 = arith.addf %108, %112 : vector<8x128xf32>
    %114 = math.tanh %113 : vector<8x128xf32>
    %c7_i32 = arith.constant 7 : i32
    %c16_i32_51 = arith.constant 16 : i32
    %115 = arith.muli %c7_i32, %c16_i32_51 : i32
    %116 = tpu.assume_multiple %115, 16 : i32
    %c0_52 = arith.constant 0 : index
    %117 = arith.index_cast %116 : i32 to index
    %c0_53 = arith.constant 0 : index
    %118 = vector.load %arg2[%c0_52, %117, %c0_53] : memref<1x128x16xf32, #tpu.memory_space<vmem>>, vector<1x16x16xf32>
    %119 = vector.shape_cast %118 : vector<1x16x16xf32> to vector<16x16xf32>
    %cst_54 = arith.constant dense<0.000000e+00> : vector<16x128xf32>
    %120 = tpu.matmul %119, %0, %cst_54 {dimension_numbers = #tpu.dot_dimension_numbers<[1], [0], [0], [1], [0, 0, 1, 1], [], []>} : vector<16x16xf32>, vector<16x128xf32>, vector<16x128xf32> -> vector<16x128xf32>
    %121 = arith.addf %120, %4 : vector<16x128xf32>
    %122 = vector.extract_strided_slice %121 {offsets = [0, 0], sizes = [8, 128], strides = [1, 1]} : vector<16x128xf32> to vector<8x128xf32>
    %123 = vector.extract_strided_slice %121 {offsets = [8, 0], sizes = [8, 128], strides = [1, 1]} : vector<16x128xf32> to vector<8x128xf32>
    %cst_55 = arith.constant dense<0.000000e+00> : vector<8x128xf32>
    %124 = tpu.matmul %111, %1, %cst_55 {dimension_numbers = #tpu.dot_dimension_numbers<[1], [0], [0], [1], [0, 0, 1, 1], [], []>} : vector<8x128xf32>, vector<128x128xf32>, vector<8x128xf32> -> vector<8x128xf32>
    %125 = arith.addf %122, %124 : vector<8x128xf32>
    %126 = math.tanh %125 : vector<8x128xf32>
    %cst_56 = arith.constant dense<0.000000e+00> : vector<8x128xf32>
    %127 = tpu.matmul %114, %1, %cst_56 {dimension_numbers = #tpu.dot_dimension_numbers<[1], [0], [0], [1], [0, 0, 1, 1], [], []>} : vector<8x128xf32>, vector<128x128xf32>, vector<8x128xf32> -> vector<8x128xf32>
    %128 = arith.addf %123, %127 : vector<8x128xf32>
    %129 = math.tanh %128 : vector<8x128xf32>
    %c8_i32 = arith.constant 8 : i32
    %c0_57 = arith.constant 0 : index
    %c0_58 = arith.constant 0 : index
    %130 = vector.load %arg10[%c0_57, %c0_58] : memref<8x128xf32, #tpu.memory_space<vmem>>, vector<8x128xf32>
    tpu.vector_store %arg10[%c0_57, %c0_58], %126 {strides = array<i32>} : memref<8x128xf32, #tpu.memory_space<vmem>>, vector<8x128xf32>,
    %c0_59 = arith.constant 0 : index
    %c0_60 = arith.constant 0 : index
    %131 = vector.load %arg11[%c0_59, %c0_60] : memref<8x128xf32, #tpu.memory_space<vmem>>, vector<8x128xf32>
    tpu.vector_store %arg11[%c0_59, %c0_60], %129 {strides = array<i32>} : memref<8x128xf32, #tpu.memory_space<vmem>>, vector<8x128xf32>,
    %c0_i32_61 = arith.constant 0 : i32
    %132 = arith.cmpi eq, %arg1, %c0_i32_61 : i32
    %133 = arith.extui %132 : i1 to i32
    %c0_i32_62 = arith.constant 0 : i32
    %134 = arith.cmpi ne, %133, %c0_i32_62 : i32
    scf.if %134 {
      %c0_63 = arith.constant 0 : index
      %c0_64 = arith.constant 0 : index
      %135 = vector.load %arg6[%c0_63, %c0_64] : memref<1x128xf32, #tpu.memory_space<vmem>>, vector<1x128xf32>
      %136 = vector.broadcast %135 : vector<1x128xf32> to vector<8x128xf32>
      %137 = arith.mulf %126, %136 : vector<8x128xf32>
      %c0_65 = arith.constant 0 : index
      %c0_66 = arith.constant 0 : index
      %138 = vector.load %arg7[%c0_65, %c0_66] : memref<1x128xf32, #tpu.memory_space<vmem>>, vector<1x128xf32>
      %139 = vector.broadcast %138 : vector<1x128xf32> to vector<8x128xf32>
      %140 = arith.mulf %129, %139 : vector<8x128xf32>
      %141 = arith.addf %137, %140 : vector<8x128xf32>
      %cst_67 = arith.constant dense<0.000000e+00> : vector<8xf32>
      %142 = vector.multi_reduction <add>, %141, %cst_67 [1] : vector<8x128xf32> to vector<8xf32>
      %143 = vector.shape_cast %142 : vector<8xf32> to vector<8x1xf32>
      %c0_68 = arith.constant 0 : index
      %c0_69 = arith.constant 0 : index
      %144 = vector.load %arg8[%c0_68, %c0_69] : memref<1x1xf32, #tpu.memory_space<vmem>>, vector<1x1xf32>
      %145 = vector.broadcast %144 : vector<1x1xf32> to vector<8x1xf32>
      %146 = arith.addf %143, %145 : vector<8x1xf32>
      %147 = arith.negf %146 : vector<8x1xf32>
      %148 = math.exp %147 : vector<8x1xf32>
      %cst_70 = arith.constant 1.000000e+00 : f32
      %149 = vector.broadcast %cst_70 : f32 to vector<8x1xf32>
      %150 = arith.addf %149, %148 : vector<8x1xf32>
      %151 = arith.divf %149, %150 : vector<8x1xf32>
      %c0_71 = arith.constant 0 : index
      %c0_72 = arith.constant 0 : index
      %152 = vector.load %arg9[%c0_71, %c0_72] : memref<8x1xf32, #tpu.memory_space<vmem>>, vector<8x1xf32>
      tpu.vector_store %arg9[%c0_71, %c0_72], %151 {strides = array<i32>} : memref<8x1xf32, #tpu.memory_space<vmem>>, vector<8x1xf32>,
    } else {
    }
    return
  }
  func.func @transform_0(%arg0: i32, %arg1: i32) -> (i32, i32, i32) {
    %c0_i32 = arith.constant 0 : i32
    %c0_i32_0 = arith.constant 0 : i32
    return %arg0, %arg1, %c0_i32 : i32, i32, i32
  }
  func.func @transform_1(%arg0: i32, %arg1: i32) -> (i32, i32) {
    %c0_i32 = arith.constant 0 : i32
    %c0_i32_0 = arith.constant 0 : i32
    %c0_i32_1 = arith.constant 0 : i32
    return %c0_i32, %c0_i32_0 : i32, i32
  }
  func.func @transform_2(%arg0: i32, %arg1: i32) -> (i32, i32) {
    %c0_i32 = arith.constant 0 : i32
    %c0_i32_0 = arith.constant 0 : i32
    %c0_i32_1 = arith.constant 0 : i32
    return %c0_i32, %c0_i32_0 : i32, i32
  }
  func.func @transform_3(%arg0: i32, %arg1: i32) -> (i32, i32) {
    %c0_i32 = arith.constant 0 : i32
    %c0_i32_0 = arith.constant 0 : i32
    %c0_i32_1 = arith.constant 0 : i32
    return %c0_i32, %c0_i32_0 : i32, i32
  }
  func.func @transform_4(%arg0: i32, %arg1: i32) -> (i32, i32) {
    %c0_i32 = arith.constant 0 : i32
    %c0_i32_0 = arith.constant 0 : i32
    %c0_i32_1 = arith.constant 0 : i32
    return %c0_i32, %c0_i32_0 : i32, i32
  }
  func.func @transform_5(%arg0: i32, %arg1: i32) -> (i32, i32) {
    %c0_i32 = arith.constant 0 : i32
    %c0_i32_0 = arith.constant 0 : i32
    %c0_i32_1 = arith.constant 0 : i32
    return %c0_i32, %c0_i32_0 : i32, i32
  }
  func.func @transform_6(%arg0: i32, %arg1: i32) -> (i32, i32) {
    %c0_i32 = arith.constant 0 : i32
    %c0_i32_0 = arith.constant 0 : i32
    %c0_i32_1 = arith.constant 0 : i32
    return %c0_i32, %c0_i32_0 : i32, i32
  }
  func.func @transform_7(%arg0: i32, %arg1: i32) -> (i32, i32) {
    %c0_i32 = arith.constant 0 : i32
    %c0_i32_0 = arith.constant 0 : i32
    return %arg0, %c0_i32 : i32, i32
  }
}

</mosaic_0001>

<llo_original>
// kernel: tpu_custom_call.1
$region0: #{tpu_custom_call.1}
  #allocation0 [shape = 'u32[]', space=smem, size = 0x4, offset = 0x4, fixed_abs, tag = 'smem constant byte address 0x4 - core index']
  #allocation1 [shape = 'u32[144,128]{1,0:T(1,128)}', space=vmem, size = 0x12000, scoped, tag = 'internal scratch']
  #allocation2 [shape = 'f32[8,128]{1,0:T(8,128)}', space=vmem, size = 0x1000, scoped, tag = 'scratch operand']
  #allocation3 [shape = 'f32[8,128]{1,0:T(8,128)}', space=vmem, size = 0x1000, scoped, tag = 'scratch operand']
  #allocation4 [shape = 'f32[1,1]{1,0:T(1,128)S(1)}', space=vmem, size = 0x200, scoped, tag = 'scoped memory for tpu_custom_call.1']
  %s0 = inlined_call_operand.vmem [shape: f32[1,128,16], index: 0, kind: input, shape index: {}]
  %s1 = inlined_call_operand.vmem [shape: f32[16,128], index: 1, kind: input, shape index: {}]
  %s2 = inlined_call_operand.vmem [shape: f32[128,128], index: 2, kind: input, shape index: {}]
  %s3 = inlined_call_operand.vmem [shape: f32[1,128], index: 3, kind: input, shape index: {}]
  %s4 = inlined_call_operand.vmem [shape: f32[1,128], index: 4, kind: input, shape index: {}]
  %s5 = inlined_call_operand.vmem [shape: f32[1,128], index: 5, kind: input, shape index: {}]
  %s6 = inlined_call_operand.<no memory space> [shape: f32[1,1], index: 6, kind: input, shape index: {}]
  %s7 = inlined_call_operand.vmem [shape: f32[8,1], index: 7, kind: output, shape index: {}]
  %s8 = sld [smem:[#allocation0]]
  $region46: #{tpu_custom_call.1} parent=0
    _
  %s10 = ssub.s32 1, %s8
  %s11 = scalar_select 0, %s10, %s8
  %v12 = vstv %s6
  %13 = vst [vmem:[#allocation4] sm:$0x1] %v12
  // Predicated region
  $region2: #{tpu_custom_call.1} parent=0 // pred_check
    _
  $region3: #{tpu_custom_call.1} parent=0 // pred_check_branch
    %15 = sbr.rel (0) target = $region5
  $region4: #{tpu_custom_call.1} parent=0 // pred_region
    _
  $region5: #{tpu_custom_call.1} parent=0 // pred_fallthru
    _
  // Predicated region
  $region6: #{tpu_custom_call.1} parent=0 // pred_check
    _
  $region7: #{tpu_custom_call.1} parent=0 // pred_check_branch
    %17 = sbr.rel (0) target = $region9
  $region8: #{tpu_custom_call.1} parent=0 // pred_region
    _
  $region9: #{tpu_custom_call.1} parent=0 // pred_fallthru
    _
  // Predicated region
  $region10: #{tpu_custom_call.1} parent=0 // pred_check
    _
  $region11: #{tpu_custom_call.1} parent=0 // pred_check_branch
    %19 = sbr.rel (0) target = $region13
  $region12: #{tpu_custom_call.1} parent=0 // pred_region
    _
  $region13: #{tpu_custom_call.1} parent=0 // pred_fallthru
    _
  // Predicated region
  $region14: #{tpu_custom_call.1} parent=0 // pred_check
    _
  $region15: #{tpu_custom_call.1} parent=0 // pred_check_branch
    %21 = sbr.rel (0) target = $region17
  $region16: #{tpu_custom_call.1} parent=0 // pred_region
    _
  $region17: #{tpu_custom_call.1} parent=0 // pred_fallthru
    _
  // Predicated region
  $region18: #{tpu_custom_call.1} parent=0 // pred_check
    _
  $region19: #{tpu_custom_call.1} parent=0 // pred_check_branch
    %23 = sbr.rel (0) target = $region21
  $region20: #{tpu_custom_call.1} parent=0 // pred_region
    _
  $region21: #{tpu_custom_call.1} parent=0 // pred_fallthru
    _
  // Predicated region
  $region22: #{tpu_custom_call.1} parent=0 // pred_check
    _
  $region23: #{tpu_custom_call.1} parent=0 // pred_check_branch
    %25 = sbr.rel (0) target = $region25
  $region24: #{tpu_custom_call.1} parent=0 // pred_region
    _
  $region25: #{tpu_custom_call.1} parent=0 // pred_fallthru
    _
  // Predicated region
  $region26: #{tpu_custom_call.1} parent=0 // pred_check
    _
  $region27: #{tpu_custom_call.1} parent=0 // pred_check_branch
    %27 = sbr.rel (0) target = $region29
  $region28: #{tpu_custom_call.1} parent=0 // pred_region
    _
  $region29: #{tpu_custom_call.1} parent=0 // pred_fallthru
    _
  %v28 = vld [vmem:[%s1] sm:$0xff]
  %v29 = vld [vmem:[%s1 + $0x8] sm:$0xff]
  %v30 = vld [vmem:[%s2] sm:$0xff]
  %v31 = vld [vmem:[%s2 + $0x8] sm:$0xff]
  %v32 = vld [vmem:[%s2 + $0x10] sm:$0xff]
  %v33 = vld [vmem:[%s2 + $0x18] sm:$0xff]
  %v34 = vld [vmem:[%s2 + $0x20] sm:$0xff]
  %v35 = vld [vmem:[%s2 + $0x28] sm:$0xff]
  %v36 = vld [vmem:[%s2 + $0x30] sm:$0xff]
  %v37 = vld [vmem:[%s2 + $0x38] sm:$0xff]
  %v38 = vld [vmem:[%s2 + $0x40] sm:$0xff]
  %v39 = vld [vmem:[%s2 + $0x48] sm:$0xff]
  %v40 = vld [vmem:[%s2 + $0x50] sm:$0xff]
  %v41 = vld [vmem:[%s2 + $0x58] sm:$0xff]
  %v42 = vld [vmem:[%s2 + $0x60] sm:$0xff]
  %v43 = vld [vmem:[%s2 + $0x68] sm:$0xff]
  %v44 = vld [vmem:[%s2 + $0x70] sm:$0xff]
  %v45 = vld [vmem:[%s2 + $0x78] sm:$0xff]
  %v46 = vld [vmem:[%s3] sm:$0x1]
  %v48 = vlaneseq
  %v49 = vshrl.u32 %v48, 7
  %v50 = vsub.s32 0, %v49
  %v51 = vrot.slane %v46, %v50
  %p53 = scmp.eq.s32.totalorder 0, 0
  // Predicated region
  $region30: #{tpu_custom_call.1} parent=0 // pred_check
    %p54 = pneg %p53
  $region31: #{tpu_custom_call.1} parent=0 // pred_check_branch
    %56 = sbr.rel (%p54) target = $region33
  $region32: #{tpu_custom_call.1} parent=0 // pred_region
    %57 = vst [vmem:[#allocation2] sm:$0xff] 0.0
    %58 = vst [vmem:[#allocation3] sm:$0xff] 0.0
  $region33: #{tpu_custom_call.1} parent=0 // pred_fallthru
    _
  %v59 = vld [vmem:[#allocation2] sm:$0xff]
  %v60 = vld [vmem:[#allocation3] sm:$0xff]
  %v61 = vld [vmem:[%s0] sm:$0xff]
  %v62 = vld [vmem:[%s0 + $0x8] sm:$0xff]
  %vm63 = vcmask 130048
  %v65 = vsel %vm63, %v61, 0
  %v68 = vsel %vm63, %v62, 0
  %70 = vmatprep.subr.mxu0 0.0
  %71 = vmatpush1.msra.mxu0 0.0
  %72 = vmatprep.subr.mxu0 0.0
  %73 = vmatpush1.msra.mxu0 0.0
  %74 = vmatprep.subr.mxu0 0.0
  %75 = vmatpush1.msra.mxu0 0.0
  %76 = vmatprep.subr.mxu0 0.0
  %77 = vmatpush1.msra.mxu0 0.0
  %78 = vmatprep.subr.mxu0 0.0
  %79 = vmatpush1.msra.mxu0 0.0
  %80 = vmatprep.subr.mxu0 0.0
  %81 = vmatpush1.msra.mxu0 0.0
  %82 = vmatprep.subr.mxu0 0.0
  %83 = vmatpush1.msra.mxu0 0.0
  %84 = vmatprep.subr.mxu0 0.0
  %85 = vmatpush1.msra.mxu0 0.0
  %86 = vmatprep.subr.mxu0 0.0
  %87 = vmatpush1.msra.mxu0 0.0
  %88 = vmatprep.subr.mxu0 0.0
  %89 = vmatpush1.msra.mxu0 0.0
  %90 = vmatprep.subr.mxu0 0.0
  %91 = vmatpush1.msra.mxu0 0.0
  %92 = vmatprep.subr.mxu0 0.0
  %93 = vmatpush1.msra.mxu0 0.0
  %94 = vmatprep.subr.mxu0 0.0
  %95 = vmatpush1.msra.mxu0 0.0
  %96 = vmatprep.subr.mxu0 0.0
  %97 = vmatpush1.msra.mxu0 0.0
  %98 = vmatprep.subr.mxu0 0.0
  %99 = vmatpush1.msra.mxu0 %v29
  %100 = vmatprep.subr.mxu0 0.0
  %101 = vmatpush1.msra.mxu0 %v28
  %102 = vmatprep.subr.mxu0 0.0
  %103 = vmatpush2.msra.mxu0 0.0
  %104 = vmatprep.subr.mxu0 0.0
  %105 = vmatpush2.msra.mxu0 0.0
  %106 = vmatprep.subr.mxu0 0.0
  %107 = vmatpush2.msra.mxu0 0.0
  %108 = vmatprep.subr.mxu0 0.0
  %109 = vmatpush2.msra.mxu0 0.0
  %110 = vmatprep.subr.mxu0 0.0
  %111 = vmatpush2.msra.mxu0 0.0
  %112 = vmatprep.subr.mxu0 0.0
  %113 = vmatpush2.msra.mxu0 0.0
  %114 = vmatprep.subr.mxu0 0.0
  %115 = vmatpush2.msra.mxu0 0.0
  %116 = vmatprep.subr.mxu0 0.0
  %117 = vmatpush2.msra.mxu0 0.0
  %118 = vmatprep.subr.mxu0 0.0
  %119 = vmatpush2.msra.mxu0 0.0
  %120 = vmatprep.subr.mxu0 0.0
  %121 = vmatpush2.msra.mxu0 0.0
  %122 = vmatprep.subr.mxu0 0.0
  %123 = vmatpush2.msra.mxu0 0.0
  %124 = vmatprep.subr.mxu0 0.0
  %125 = vmatpush2.msra.mxu0 0.0
  %126 = vmatprep.subr.mxu0 0.0
  %127 = vmatpush2.msra.mxu0 0.0
  %128 = vmatprep.subr.mxu0 0.0
  %129 = vmatpush2.msra.mxu0 0.0
  %130 = vmatprep.subr.mxu0 0.0
  %131 = vmatpush2.msra.mxu0 0.0
  %132 = vmatprep.subr.mxu0 0.0
  %133 = vmatpush2.msra.mxu0 0.0
  %134 = vmatprep.mubr.f32.mxu0 0.0
  %135 = vmatmul.mubr.f32.gmra.mxu0 %v65
  %v136 = vpop.f32.mrf.mxu0
  %v137 = vadd.f32 %v51, %v136
  %v138 = vpop.f32.mrf.mxu0
  %139 = vmatprep.mubr.f32.mxu0 0.0
  %140 = vmatmul.mubr.f32.gmra.mxu0 %v68
  %v141 = vpop.f32.mrf.mxu0
  %v142 = vadd.f32 %v51, %v141
  %v143 = vpop.f32.mrf.mxu0
  %144 = vdwg.mxu0
  %145 = vmatprep.subr.mxu0 0.0
  %146 = vmatpush1.msra.mxu0 %v45
  %147 = vmatprep.subr.mxu0 0.0
  %148 = vmatpush1.msra.mxu0 %v44
  %149 = vmatprep.subr.mxu0 0.0
  %150 = vmatpush1.msra.mxu0 %v43
  %151 = vmatprep.subr.mxu0 0.0
  %152 = vmatpush1.msra.mxu0 %v42
  %153 = vmatprep.subr.mxu0 0.0
  %154 = vmatpush1.msra.mxu0 %v41
  %155 = vmatprep.subr.mxu0 0.0
  %156 = vmatpush1.msra.mxu0 %v40
  %157 = vmatprep.subr.mxu0 0.0
  %158 = vmatpush1.msra.mxu0 %v39
  %159 = vmatprep.subr.mxu0 0.0
  %160 = vmatpush1.msra.mxu0 %v38
  %161 = vmatprep.subr.mxu0 0.0
  %162 = vmatpush1.msra.mxu0 %v37
  %163 = vmatprep.subr.mxu0 0.0
  %164 = vmatpush1.msra.mxu0 %v36
  %165 = vmatprep.subr.mxu0 0.0
  %166 = vmatpush1.msra.mxu0 %v35
  %167 = vmatprep.subr.mxu0 0.0
  %168 = vmatpush1.msra.mxu0 %v34
  %169 = vmatprep.subr.mxu0 0.0
  %170 = vmatpush1.msra.mxu0 %v33
  %171 = vmatprep.subr.mxu0 0.0
  %172 = vmatpush1.msra.mxu0 %v32
  %173 = vmatprep.subr.mxu0 0.0
  %174 = vmatpush1.msra.mxu0 %v31
  %175 = vmatprep.subr.mxu0 0.0
  %176 = vmatpush1.msra.mxu0 %v30
  %177 = vmatprep.subr.mxu0 0.0
  %178 = vmatpush2.msra.mxu0 0.0
  %179 = vmatprep.subr.mxu0 0.0
  %180 = vmatpush2.msra.mxu0 0.0
  %181 = vmatprep.subr.mxu0 0.0
  %182 = vmatpush2.msra.mxu0 0.0
  %183 = vmatprep.subr.mxu0 0.0
  %184 = vmatpush2.msra.mxu0 0.0
  %185 = vmatprep.subr.mxu0 0.0
  %186 = vmatpush2.msra.mxu0 0.0
  %187 = vmatprep.subr.mxu0 0.0
  %188 = vmatpush2.msra.mxu0 0.0
  %189 = vmatprep.subr.mxu0 0.0
  %190 = vmatpush2.msra.mxu0 0.0
  %191 = vmatprep.subr.mxu0 0.0
  %192 = vmatpush2.msra.mxu0 0.0
  %193 = vmatprep.subr.mxu0 0.0
  %194 = vmatpush2.msra.mxu0 0.0
  %195 = vmatprep.subr.mxu0 0.0
  %196 = vmatpush2.msra.mxu0 0.0
  %197 = vmatprep.subr.mxu0 0.0
  %198 = vmatpush2.msra.mxu0 0.0
  %199 = vmatprep.subr.mxu0 0.0
  %200 = vmatpush2.msra.mxu0 0.0
  %201 = vmatprep.subr.mxu0 0.0
  %202 = vmatpush2.msra.mxu0 0.0
  %203 = vmatprep.subr.mxu0 0.0
  %204 = vmatpush2.msra.mxu0 0.0
  %205 = vmatprep.subr.mxu0 0.0
  %206 = vmatpush2.msra.mxu0 0.0
  %207 = vmatprep.subr.mxu0 0.0
  %208 = vmatpush2.msra.mxu0 0.0
  %209 = vmatprep.mubr.f32.mxu0 0.0
  %210 = vmatmul.mubr.f32.gmra.mxu0 %v59
  %v211 = vpop.f32.mrf.mxu0
  %v212 = vadd.f32 0.0, %v211
  %v213 = vpop.f32.mrf.mxu0
  %214 = vdwg.mxu0
  %v215 = vadd.f32 %v137, %v212
  %v216 = vtanh.pop %v215
  %217 = vmatprep.subr.mxu0 0.0
  %218 = vmatpush1.msra.mxu0 %v45
  %219 = vmatprep.subr.mxu0 0.0
  %220 = vmatpush1.msra.mxu0 %v44
  %221 = vmatprep.subr.mxu0 0.0
  %222 = vmatpush1.msra.mxu0 %v43
  %223 = vmatprep.subr.mxu0 0.0
  %224 = vmatpush1.msra.mxu0 %v42
  %225 = vmatprep.subr.mxu0 0.0
  %226 = vmatpush1.msra.mxu0 %v41
  %227 = vmatprep.subr.mxu0 0.0
  %228 = vmatpush1.msra.mxu0 %v40
  %229 = vmatprep.subr.mxu0 0.0
  %230 = vmatpush1.msra.mxu0 %v39
  %231 = vmatprep.subr.mxu0 0.0
  %232 = vmatpush1.msra.mxu0 %v38
  %233 = vmatprep.subr.mxu0 0.0
  %234 = vmatpush1.msra.mxu0 %v37
  %235 = vmatprep.subr.mxu0 0.0
  %236 = vmatpush1.msra.mxu0 %v36
  %237 = vmatprep.subr.mxu0 0.0
  %238 = vmatpush1.msra.mxu0 %v35
  %239 = vmatprep.subr.mxu0 0.0
  %240 = vmatpush1.msra.mxu0 %v34
  %241 = vmatprep.subr.mxu0 0.0
  %242 = vmatpush1.msra.mxu0 %v33
  %243 = vmatprep.subr.mxu0 0.0
  %244 = vmatpush1.msra.mxu0 %v32
  %245 = vmatprep.subr.mxu0 0.0
  %246 = vmatpush1.msra.mxu0 %v31
  %247 = vmatprep.subr.mxu0 0.0
  %248 = vmatpush1.msra.mxu0 %v30
  %249 = vmatprep.subr.mxu0 0.0
  %250 = vmatpush2.msra.mxu0 0.0
  %251 = vmatprep.subr.mxu0 0.0
  %252 = vmatpush2.msra.mxu0 0.0
  %253 = vmatprep.subr.mxu0 0.0
  %254 = vmatpush2.msra.mxu0 0.0
  %255 = vmatprep.subr.mxu0 0.0
  %256 = vmatpush2.msra.mxu0 0.0
  %257 = vmatprep.subr.mxu0 0.0
  %258 = vmatpush2.msra.mxu0 0.0
  %259 = vmatprep.subr.mxu0 0.0
  %260 = vmatpush2.msra.mxu0 0.0
  %261 = vmatprep.subr.mxu0 0.0
  %262 = vmatpush2.msra.mxu0 0.0
  %263 = vmatprep.subr.mxu0 0.0
  %264 = vmatpush2.msra.mxu0 0.0
  %265 = vmatprep.subr.mxu0 0.0
  %266 = vmatpush2.msra.mxu0 0.0
  %267 = vmatprep.subr.mxu0 0.0
  %268 = vmatpush2.msra.mxu0 0.0
  %269 = vmatprep.subr.mxu0 0.0
  %270 = vmatpush2.msra.mxu0 0.0
  %271 = vmatprep.subr.mxu0 0.0
  %272 = vmatpush2.msra.mxu0 0.0
  %273 = vmatprep.subr.mxu0 0.0
  %274 = vmatpush2.msra.mxu0 0.0
  %275 = vmatprep.subr.mxu0 0.0
  %276 = vmatpush2.msra.mxu0 0.0
  %277 = vmatprep.subr.mxu0 0.0
  %278 = vmatpush2.msra.mxu0 0.0
  %279 = vmatprep.subr.mxu0 0.0
  %280 = vmatpush2.msra.mxu0 0.0
  %281 = vmatprep.mubr.f32.mxu0 0.0
  %282 = vmatmul.mubr.f32.gmra.mxu0 %v60
  %v283 = vpop.f32.mrf.mxu0
  %v284 = vadd.f32 0.0, %v283
  %v285 = vpop.f32.mrf.mxu0
  %286 = vdwg.mxu0
  %v287 = vadd.f32 %v142, %v284
  %v288 = vtanh.pop %v287
  %s289 = scalar_lea.vmem %s0, 16
  %v290 = vld [vmem:[%s289] sm:$0xff]
  %v291 = vld [vmem:[%s289 + $0x8] sm:$0xff]
  %v293 = vsel %vm63, %v290, 0
  %v296 = vsel %vm63, %v291, 0
  %298 = vmatprep.subr.mxu0 0.0
  %299 = vmatpush1.msra.mxu0 0.0
  %300 = vmatprep.subr.mxu0 0.0
  %301 = vmatpush1.msra.mxu0 0.0
  %302 = vmatprep.subr.mxu0 0.0
  %303 = vmatpush1.msra.mxu0 0.0
  %304 = vmatprep.subr.mxu0 0.0
  %305 = vmatpush1.msra.mxu0 0.0
  %306 = vmatprep.subr.mxu0 0.0
  %307 = vmatpush1.msra.mxu0 0.0
  %308 = vmatprep.subr.mxu0 0.0
  %309 = vmatpush1.msra.mxu0 0.0
  %310 = vmatprep.subr.mxu0 0.0
  %311 = vmatpush1.msra.mxu0 0.0
  %312 = vmatprep.subr.mxu0 0.0
  %313 = vmatpush1.msra.mxu0 0.0
  %314 = vmatprep.subr.mxu0 0.0
  %315 = vmatpush1.msra.mxu0 0.0
  %316 = vmatprep.subr.mxu0 0.0
  %317 = vmatpush1.msra.mxu0 0.0
  %318 = vmatprep.subr.mxu0 0.0
  %319 = vmatpush1.msra.mxu0 0.0
  %320 = vmatprep.subr.mxu0 0.0
  %321 = vmatpush1.msra.mxu0 0.0
  %322 = vmatprep.subr.mxu0 0.0
  %323 = vmatpush1.msra.mxu0 0.0
  %324 = vmatprep.subr.mxu0 0.0
  %325 = vmatpush1.msra.mxu0 0.0
  %326 = vmatprep.subr.mxu0 0.0
  %327 = vmatpush1.msra.mxu0 %v29
  %328 = vmatprep.subr.mxu0 0.0
  %329 = vmatpush1.msra.mxu0 %v28
  %330 = vmatprep.subr.mxu0 0.0
  %331 = vmatpush2.msra.mxu0 0.0
  %332 = vmatprep.subr.mxu0 0.0
  %333 = vmatpush2.msra.mxu0 0.0
  %334 = vmatprep.subr.mxu0 0.0
  %335 = vmatpush2.msra.mxu0 0.0
  %336 = vmatprep.subr.mxu0 0.0
  %337 = vmatpush2.msra.mxu0 0.0
  %338 = vmatprep.subr.mxu0 0.0
  %339 = vmatpush2.msra.mxu0 0.0
  %340 = vmatprep.subr.mxu0 0.0
  %341 = vmatpush2.msra.mxu0 0.0
  %342 = vmatprep.subr.mxu0 0.0
  %343 = vmatpush2.msra.mxu0 0.0
  %344 = vmatprep.subr.mxu0 0.0
  %345 = vmatpush2.msra.mxu0 0.0
  %346 = vmatprep.subr.mxu0 0.0
  %347 = vmatpush2.msra.mxu0 0.0
  %348 = vmatprep.subr.mxu0 0.0
  %349 = vmatpush2.msra.mxu0 0.0
  %350 = vmatprep.subr.mxu0 0.0
  %351 = vmatpush2.msra.mxu0 0.0
  %352 = vmatprep.subr.mxu0 0.0
  %353 = vmatpush2.msra.mxu0 0.0
  %354 = vmatprep.subr.mxu0 0.0
  %355 = vmatpush2.msra.mxu0 0.0
  %356 = vmatprep.subr.mxu0 0.0
  %357 = vmatpush2.msra.mxu0 0.0
  %358 = vmatprep.subr.mxu0 0.0
  %359 = vmatpush2.msra.mxu0 0.0
  %360 = vmatprep.subr.mxu0 0.0
  %361 = vmatpush2.msra.mxu0 0.0
  %362 = vmatprep.mubr.f32.mxu0 0.0
  %363 = vmatmul.mubr.f32.gmra.mxu0 %v293
  %v364 = vpop.f32.mrf.mxu0
  %v365 = vadd.f32 %v51, %v364
  %v366 = vpop.f32.mrf.mxu0
  %367 = vmatprep.mubr.f32.mxu0 0.0
  %368 = vmatmul.mubr.f32.gmra.mxu0 %v296
  %v369 = vpop.f32.mrf.mxu0
  %v370 = vadd.f32 %v51, %v369
  %v371 = vpop.f32.mrf.mxu0
  %372 = vdwg.mxu0
  %373 = vmatprep.subr.mxu0 0.0
  %374 = vmatpush1.msra.mxu0 %v45
  %375 = vmatprep.subr.mxu0 0.0
  %376 = vmatpush1.msra.mxu0 %v44
  %377 = vmatprep.subr.mxu0 0.0
  %378 = vmatpush1.msra.mxu0 %v43
  %379 = vmatprep.subr.mxu0 0.0
  %380 = vmatpush1.msra.mxu0 %v42
  %381 = vmatprep.subr.mxu0 0.0
  %382 = vmatpush1.msra.mxu0 %v41
  %383 = vmatprep.subr.mxu0 0.0
  %384 = vmatpush1.msra.mxu0 %v40
  %385 = vmatprep.subr.mxu0 0.0
  %386 = vmatpush1.msra.mxu0 %v39
  %387 = vmatprep.subr.mxu0 0.0
  %388 = vmatpush1.msra.mxu0 %v38
  %389 = vmatprep.subr.mxu0 0.0
  %390 = vmatpush1.msra.mxu0 %v37
  %391 = vmatprep.subr.mxu0 0.0
  %392 = vmatpush1.msra.mxu0 %v36
  %393 = vmatprep.subr.mxu0 0.0
  %394 = vmatpush1.msra.mxu0 %v35
  %395 = vmatprep.subr.mxu0 0.0
  %396 = vmatpush1.msra.mxu0 %v34
  %397 = vmatprep.subr.mxu0 0.0
  %398 = vmatpush1.msra.mxu0 %v33
  %399 = vmatprep.subr.mxu0 0.0
  %400 = vmatpush1.msra.mxu0 %v32
  %401 = vmatprep.subr.mxu0 0.0
  %402 = vmatpush1.msra.mxu0 %v31
  %403 = vmatprep.subr.mxu0 0.0
  %404 = vmatpush1.msra.mxu0 %v30
  %405 = vmatprep.subr.mxu0 0.0
  %406 = vmatpush2.msra.mxu0 0.0
  %407 = vmatprep.subr.mxu0 0.0
  %408 = vmatpush2.msra.mxu0 0.0
  %409 = vmatprep.subr.mxu0 0.0
  %410 = vmatpush2.msra.mxu0 0.0
  %411 = vmatprep.subr.mxu0 0.0
  %412 = vmatpush2.msra.mxu0 0.0
  %413 = vmatprep.subr.mxu0 0.0
  %414 = vmatpush2.msra.mxu0 0.0
  %415 = vmatprep.subr.mxu0 0.0
  %416 = vmatpush2.msra.mxu0 0.0
  %417 = vmatprep.subr.mxu0 0.0
  %418 = vmatpush2.msra.mxu0 0.0
  %419 = vmatprep.subr.mxu0 0.0
  %420 = vmatpush2.msra.mxu0 0.0
  %421 = vmatprep.subr.mxu0 0.0
  %422 = vmatpush2.msra.mxu0 0.0
  %423 = vmatprep.subr.mxu0 0.0
  %424 = vmatpush2.msra.mxu0 0.0
  %425 = vmatprep.subr.mxu0 0.0
  %426 = vmatpush2.msra.mxu0 0.0
  %427 = vmatprep.subr.mxu0 0.0
  %428 = vmatpush2.msra.mxu0 0.0
  %429 = vmatprep.subr.mxu0 0.0
  %430 = vmatpush2.msra.mxu0 0.0
  %431 = vmatprep.subr.mxu0 0.0
  %432 = vmatpush2.msra.mxu0 0.0
  %433 = vmatprep.subr.mxu0 0.0
  %434 = vmatpush2.msra.mxu0 0.0
  %435 = vmatprep.subr.mxu0 0.0
  %436 = vmatpush2.msra.mxu0 0.0
  %437 = vmatprep.mubr.f32.mxu0 0.0
  %438 = vmatmul.mubr.f32.gmra.mxu0 %v216
  %v439 = vpop.f32.mrf.mxu0
  %v440 = vadd.f32 0.0, %v439
  %v441 = vpop.f32.mrf.mxu0
  %442 = vdwg.mxu0
  %v443 = vadd.f32 %v365, %v440
  %v444 = vtanh.pop %v443
  %445 = vmatprep.subr.mxu0 0.0
  %446 = vmatpush1.msra.mxu0 %v45
  %447 = vmatprep.subr.mxu0 0.0
  %448 = vmatpush1.msra.mxu0 %v44
  %449 = vmatprep.subr.mxu0 0.0
  %450 = vmatpush1.msra.mxu0 %v43
  %451 = vmatprep.subr.mxu0 0.0
  %452 = vmatpush1.msra.mxu0 %v42
  %453 = vmatprep.subr.mxu0 0.0
  %454 = vmatpush1.msra.mxu0 %v41
  %455 = vmatprep.subr.mxu0 0.0
  %456 = vmatpush1.msra.mxu0 %v40
  %457 = vmatprep.subr.mxu0 0.0
  %458 = vmatpush1.msra.mxu0 %v39
  %459 = vmatprep.subr.mxu0 0.0
  %460 = vmatpush1.msra.mxu0 %v38
  %461 = vmatprep.subr.mxu0 0.0
  %462 = vmatpush1.msra.mxu0 %v37
  %463 = vmatprep.subr.mxu0 0.0
  %464 = vmatpush1.msra.mxu0 %v36
  %465 = vmatprep.subr.mxu0 0.0
  %466 = vmatpush1.msra.mxu0 %v35
  %467 = vmatprep.subr.mxu0 0.0
  %468 = vmatpush1.msra.mxu0 %v34
  %469 = vmatprep.subr.mxu0 0.0
  %470 = vmatpush1.msra.mxu0 %v33
  %471 = vmatprep.subr.mxu0 0.0
  %472 = vmatpush1.msra.mxu0 %v32
  %473 = vmatprep.subr.mxu0 0.0
  %474 = vmatpush1.msra.mxu0 %v31
  %475 = vmatprep.subr.mxu0 0.0
  %476 = vmatpush1.msra.mxu0 %v30
  %477 = vmatprep.subr.mxu0 0.0
  %478 = vmatpush2.msra.mxu0 0.0
  %479 = vmatprep.subr.mxu0 0.0
  %480 = vmatpush2.msra.mxu0 0.0
  %481 = vmatprep.subr.mxu0 0.0
  %482 = vmatpush2.msra.mxu0 0.0
  %483 = vmatprep.subr.mxu0 0.0
  %484 = vmatpush2.msra.mxu0 0.0
  %485 = vmatprep.subr.mxu0 0.0
  %486 = vmatpush2.msra.mxu0 0.0
  %487 = vmatprep.subr.mxu0 0.0
  %488 = vmatpush2.msra.mxu0 0.0
  %489 = vmatprep.subr.mxu0 0.0
  %490 = vmatpush2.msra.mxu0 0.0
  %491 = vmatprep.subr.mxu0 0.0
  %492 = vmatpush2.msra.mxu0 0.0
  %493 = vmatprep.subr.mxu0 0.0
  %494 = vmatpush2.msra.mxu0 0.0
  %495 = vmatprep.subr.mxu0 0.0
  %496 = vmatpush2.msra.mxu0 0.0
  %497 = vmatprep.subr.mxu0 0.0
  %498 = vmatpush2.msra.mxu0 0.0
  %499 = vmatprep.subr.mxu0 0.0
  %500 = vmatpush2.msra.mxu0 0.0
  %501 = vmatprep.subr.mxu0 0.0
  %502 = vmatpush2.msra.mxu0 0.0
  %503 = vmatprep.subr.mxu0 0.0
  %504 = vmatpush2.msra.mxu0 0.0
  %505 = vmatprep.subr.mxu0 0.0
  %506 = vmatpush2.msra.mxu0 0.0
  %507 = vmatprep.subr.mxu0 0.0
  %508 = vmatpush2.msra.mxu0 0.0
  %509 = vmatprep.mubr.f32.mxu0 0.0
  %510 = vmatmul.mubr.f32.gmra.mxu0 %v288
  %v511 = vpop.f32.mrf.mxu0
  %v512 = vadd.f32 0.0, %v511
  %v513 = vpop.f32.mrf.mxu0
  %514 = vdwg.mxu0
  %v515 = vadd.f32 %v370, %v512
  %v516 = vtanh.pop %v515
  %s517 = scalar_lea.vmem %s0, 32
  %v518 = vld [vmem:[%s517] sm:$0xff]
  %v519 = vld [vmem:[%s517 + $0x8] sm:$0xff]
  %v521 = vsel %vm63, %v518, 0
  %v524 = vsel %vm63, %v519, 0
  %526 = vmatprep.subr.mxu0 0.0
  %527 = vmatpush1.msra.mxu0 0.0
  %528 = vmatprep.subr.mxu0 0.0
  %529 = vmatpush1.msra.mxu0 0.0
  %530 = vmatprep.subr.mxu0 0.0
  %531 = vmatpush1.msra.mxu0 0.0
  %532 = vmatprep.subr.mxu0 0.0
  %533 = vmatpush1.msra.mxu0 0.0
  %534 = vmatprep.subr.mxu0 0.0
  %535 = vmatpush1.msra.mxu0 0.0
  %536 = vmatprep.subr.mxu0 0.0
  %537 = vmatpush1.msra.mxu0 0.0
  %538 = vmatprep.subr.mxu0 0.0
  %539 = vmatpush1.msra.mxu0 0.0
  %540 = vmatprep.subr.mxu0 0.0
  %541 = vmatpush1.msra.mxu0 0.0
  %542 = vmatprep.subr.mxu0 0.0
  %543 = vmatpush1.msra.mxu0 0.0
  %544 = vmatprep.subr.mxu0 0.0
  %545 = vmatpush1.msra.mxu0 0.0
  %546 = vmatprep.subr.mxu0 0.0
  %547 = vmatpush1.msra.mxu0 0.0
  %548 = vmatprep.subr.mxu0 0.0
  %549 = vmatpush1.msra.mxu0 0.0
  %550 = vmatprep.subr.mxu0 0.0
  %551 = vmatpush1.msra.mxu0 0.0
  %552 = vmatprep.subr.mxu0 0.0
  %553 = vmatpush1.msra.mxu0 0.0
  %554 = vmatprep.subr.mxu0 0.0
  %555 = vmatpush1.msra.mxu0 %v29
  %556 = vmatprep.subr.mxu0 0.0
  %557 = vmatpush1.msra.mxu0 %v28
  %558 = vmatprep.subr.mxu0 0.0
  %559 = vmatpush2.msra.mxu0 0.0
  %560 = vmatprep.subr.mxu0 0.0
  %561 = vmatpush2.msra.mxu0 0.0
  %562 = vmatprep.subr.mxu0 0.0
  %563 = vmatpush2.msra.mxu0 0.0
  %564 = vmatprep.subr.mxu0 0.0
  %565 = vmatpush2.msra.mxu0 0.0
  %566 = vmatprep.subr.mxu0 0.0
  %567 = vmatpush2.msra.mxu0 0.0
  %568 = vmatprep.subr.mxu0 0.0
  %569 = vmatpush2.msra.mxu0 0.0
  %570 = vmatprep.subr.mxu0 0.0
  %571 = vmatpush2.msra.mxu0 0.0
  %572 = vmatprep.subr.mxu0 0.0
  %573 = vmatpush2.msra.mxu0 0.0
  %574 = vmatprep.subr.mxu0 0.0
  %575 = vmatpush2.msra.mxu0 0.0
  %576 = vmatprep.subr.mxu0 0.0
  %577 = vmatpush2.msra.mxu0 0.0
  %578 = vmatprep.subr.mxu0 0.0
  %579 = vmatpush2.msra.mxu0 0.0
  %580 = vmatprep.subr.mxu0 0.0
  %581 = vmatpush2.msra.mxu0 0.0
  %582 = vmatprep.subr.mxu0 0.0
  %583 = vmatpush2.msra.mxu0 0.0
  %584 = vmatprep.subr.mxu0 0.0
  %585 = vmatpush2.msra.mxu0 0.0
  %586 = vmatprep.subr.mxu0 0.0
  %587 = vmatpush2.msra.mxu0 0.0
  %588 = vmatprep.subr.mxu0 0.0
  %589 = vmatpush2.msra.mxu0 0.0
  %590 = vmatprep.mubr.f32.mxu0 0.0
  %591 = vmatmul.mubr.f32.gmra.mxu0 %v521
  %v592 = vpop.f32.mrf.mxu0
  %v593 = vadd.f32 %v51, %v592
  %v594 = vpop.f32.mrf.mxu0
  %595 = vmatprep.mubr.f32.mxu0 0.0
  %596 = vmatmul.mubr.f32.gmra.mxu0 %v524
  %v597 = vpop.f32.mrf.mxu0
  %v598 = vadd.f32 %v51, %v597
  %v599 = vpop.f32.mrf.mxu0
  %600 = vdwg.mxu0
  %601 = vmatprep.subr.mxu0 0.0
  %602 = vmatpush1.msra.mxu0 %v45
  %603 = vmatprep.subr.mxu0 0.0
  %604 = vmatpush1.msra.mxu0 %v44
  %605 = vmatprep.subr.mxu0 0.0
  %606 = vmatpush1.msra.mxu0 %v43
  %607 = vmatprep.subr.mxu0 0.0
  %608 = vmatpush1.msra.mxu0 %v42
  %609 = vmatprep.subr.mxu0 0.0
  %610 = vmatpush1.msra.mxu0 %v41
  %611 = vmatprep.subr.mxu0 0.0
  %612 = vmatpush1.msra.mxu0 %v40
  %613 = vmatprep.subr.mxu0 0.0
  %614 = vmatpush1.msra.mxu0 %v39
  %615 = vmatprep.subr.mxu0 0.0
  %616 = vmatpush1.msra.mxu0 %v38
  %617 = vmatprep.subr.mxu0 0.0
  %618 = vmatpush1.msra.mxu0 %v37
  %619 = vmatprep.subr.mxu0 0.0
  %620 = vmatpush1.msra.mxu0 %v36
  %621 = vmatprep.subr.mxu0 0.0
  %622 = vmatpush1.msra.mxu0 %v35
  %623 = vmatprep.subr.mxu0 0.0
  %624 = vmatpush1.msra.mxu0 %v34
  %625 = vmatprep.subr.mxu0 0.0
  %626 = vmatpush1.msra.mxu0 %v33
  %627 = vmatprep.subr.mxu0 0.0
  %628 = vmatpush1.msra.mxu0 %v32
  %629 = vmatprep.subr.mxu0 0.0
  %630 = vmatpush1.msra.mxu0 %v31
  %631 = vmatprep.subr.mxu0 0.0
  %632 = vmatpush1.msra.mxu0 %v30
  %633 = vmatprep.subr.mxu0 0.0
  %634 = vmatpush2.msra.mxu0 0.0
  %635 = vmatprep.subr.mxu0 0.0
  %636 = vmatpush2.msra.mxu0 0.0
  %637 = vmatprep.subr.mxu0 0.0
  %638 = vmatpush2.msra.mxu0 0.0
  %639 = vmatprep.subr.mxu0 0.0
  %640 = vmatpush2.msra.mxu0 0.0
  %641 = vmatprep.subr.mxu0 0.0
  %642 = vmatpush2.msra.mxu0 0.0
  %643 = vmatprep.subr.mxu0 0.0
  %644 = vmatpush2.msra.mxu0 0.0
  %645 = vmatprep.subr.mxu0 0.0
  %646 = vmatpush2.msra.mxu0 0.0
  %647 = vmatprep.subr.mxu0 0.0
  %648 = vmatpush2.msra.mxu0 0.0
  %649 = vmatprep.subr.mxu0 0.0
  %650 = vmatpush2.msra.mxu0 0.0
  %651 = vmatprep.subr.mxu0 0.0
  %652 = vmatpush2.msra.mxu0 0.0
  %653 = vmatprep.subr.mxu0 0.0
  %654 = vmatpush2.msra.mxu0 0.0
  %655 = vmatprep.subr.mxu0 0.0
  %656 = vmatpush2.msra.mxu0 0.0
  %657 = vmatprep.subr.mxu0 0.0
  %658 = vmatpush2.msra.mxu0 0.0
  %659 = vmatprep.subr.mxu0 0.0
  %660 = vmatpush2.msra.mxu0 0.0
  %661 = vmatprep.subr.mxu0 0.0
  %662 = vmatpush2.msra.mxu0 0.0
  %663 = vmatprep.subr.mxu0 0.0
  %664 = vmatpush2.msra.mxu0 0.0
  %665 = vmatprep.mubr.f32.mxu0 0.0
  %666 = vmatmul.mubr.f32.gmra.mxu0 %v444
  %v667 = vpop.f32.mrf.mxu0
  %v668 = vadd.f32 0.0, %v667
  %v669 = vpop.f32.mrf.mxu0
  %670 = vdwg.mxu0
  %v671 = vadd.f32 %v593, %v668
  %v672 = vtanh.pop %v671
  %673 = vmatprep.subr.mxu0 0.0
  %674 = vmatpush1.msra.mxu0 %v45
  %675 = vmatprep.subr.mxu0 0.0
  %676 = vmatpush1.msra.mxu0 %v44
  %677 = vmatprep.subr.mxu0 0.0
  %678 = vmatpush1.msra.mxu0 %v43
  %679 = vmatprep.subr.mxu0 0.0
  %680 = vmatpush1.msra.mxu0 %v42
  %681 = vmatprep.subr.mxu0 0.0
  %682 = vmatpush1.msra.mxu0 %v41
  %683 = vmatprep.subr.mxu0 0.0
  %684 = vmatpush1.msra.mxu0 %v40
  %685 = vmatprep.subr.mxu0 0.0
  %686 = vmatpush1.msra.mxu0 %v39
  %687 = vmatprep.subr.mxu0 0.0
  %688 = vmatpush1.msra.mxu0 %v38
  %689 = vmatprep.subr.mxu0 0.0
  %690 = vmatpush1.msra.mxu0 %v37
  %691 = vmatprep.subr.mxu0 0.0
  %692 = vmatpush1.msra.mxu0 %v36
  %693 = vmatprep.subr.mxu0 0.0
  %694 = vmatpush1.msra.mxu0 %v35
  %695 = vmatprep.subr.mxu0 0.0
  %696 = vmatpush1.msra.mxu0 %v34
  %697 = vmatprep.subr.mxu0 0.0
  %698 = vmatpush1.msra.mxu0 %v33
  %699 = vmatprep.subr.mxu0 0.0
  %700 = vmatpush1.msra.mxu0 %v32
  %701 = vmatprep.subr.mxu0 0.0
  %702 = vmatpush1.msra.mxu0 %v31
  %703 = vmatprep.subr.mxu0 0.0
  %704 = vmatpush1.msra.mxu0 %v30
  %705 = vmatprep.subr.mxu0 0.0
  %706 = vmatpush2.msra.mxu0 0.0
  %707 = vmatprep.subr.mxu0 0.0
  %708 = vmatpush2.msra.mxu0 0.0
  %709 = vmatprep.subr.mxu0 0.0
  %710 = vmatpush2.msra.mxu0 0.0
  %711 = vmatprep.subr.mxu0 0.0
  %712 = vmatpush2.msra.mxu0 0.0
  %713 = vmatprep.subr.mxu0 0.0
  %714 = vmatpush2.msra.mxu0 0.0
  %715 = vmatprep.subr.mxu0 0.0
  %716 = vmatpush2.msra.mxu0 0.0
  %717 = vmatprep.subr.mxu0 0.0
  %718 = vmatpush2.msra.mxu0 0.0
  %719 = vmatprep.subr.mxu0 0.0
  %720 = vmatpush2.msra.mxu0 0.0
  %721 = vmatprep.subr.mxu0 0.0
  %722 = vmatpush2.msra.mxu0 0.0
  %723 = vmatprep.subr.mxu0 0.0
  %724 = vmatpush2.msra.mxu0 0.0
  %725 = vmatprep.subr.mxu0 0.0
  %726 = vmatpush2.msra.mxu0 0.0
  %727 = vmatprep.subr.mxu0 0.0
  %728 = vmatpush2.msra.mxu0 0.0
  %729 = vmatprep.subr.mxu0 0.0
  %730 = vmatpush2.msra.mxu0 0.0
  %731 = vmatprep.subr.mxu0 0.0
  %732 = vmatpush2.msra.mxu0 0.0
  %733 = vmatprep.subr.mxu0 0.0
  %734 = vmatpush2.msra.mxu0 0.0
  %735 = vmatprep.subr.mxu0 0.0
  %736 = vmatpush2.msra.mxu0 0.0
  %737 = vmatprep.mubr.f32.mxu0 0.0
  %738 = vmatmul.mubr.f32.gmra.mxu0 %v516
  %v739 = vpop.f32.mrf.mxu0
  %v740 = vadd.f32 0.0, %v739
  %v741 = vpop.f32.mrf.mxu0
  %742 = vdwg.mxu0
  %v743 = vadd.f32 %v598, %v740
  %v744 = vtanh.pop %v743
  %s745 = scalar_lea.vmem %s0, 48
  %v746 = vld [vmem:[%s745] sm:$0xff]
  %v747 = vld [vmem:[%s745 + $0x8] sm:$0xff]
  %v749 = vsel %vm63, %v746, 0
  %v752 = vsel %vm63, %v747, 0
  %754 = vmatprep.subr.mxu0 0.0
  %755 = vmatpush1.msra.mxu0 0.0
  %756 = vmatprep.subr.mxu0 0.0
  %757 = vmatpush1.msra.mxu0 0.0
  %758 = vmatprep.subr.mxu0 0.0
  %759 = vmatpush1.msra.mxu0 0.0
  %760 = vmatprep.subr.mxu0 0.0
  %761 = vmatpush1.msra.mxu0 0.0
  %762 = vmatprep.subr.mxu0 0.0
  %763 = vmatpush1.msra.mxu0 0.0
  %764 = vmatprep.subr.mxu0 0.0
  %765 = vmatpush1.msra.mxu0 0.0
  %766 = vmatprep.subr.mxu0 0.0
  %767 = vmatpush1.msra.mxu0 0.0
  %768 = vmatprep.subr.mxu0 0.0
  %769 = vmatpush1.msra.mxu0 0.0
  %770 = vmatprep.subr.mxu0 0.0
  %771 = vmatpush1.msra.mxu0 0.0
  %772 = vmatprep.subr.mxu0 0.0
  %773 = vmatpush1.msra.mxu0 0.0
  %774 = vmatprep.subr.mxu0 0.0
  %775 = vmatpush1.msra.mxu0 0.0
  %776 = vmatprep.subr.mxu0 0.0
  %777 = vmatpush1.msra.mxu0 0.0
  %778 = vmatprep.subr.mxu0 0.0
  %779 = vmatpush1.msra.mxu0 0.0
  %780 = vmatprep.subr.mxu0 0.0
  %781 = vmatpush1.msra.mxu0 0.0
  %782 = vmatprep.subr.mxu0 0.0
  %783 = vmatpush1.msra.mxu0 %v29
  %784 = vmatprep.subr.mxu0 0.0
  %785 = vmatpush1.msra.mxu0 %v28
  %786 = vmatprep.subr.mxu0 0.0
  %787 = vmatpush2.msra.mxu0 0.0
  %788 = vmatprep.subr.mxu0 0.0
  %789 = vmatpush2.msra.mxu0 0.0
  %790 = vmatprep.subr.mxu0 0.0
  %791 = vmatpush2.msra.mxu0 0.0
  %792 = vmatprep.subr.mxu0 0.0
  %793 = vmatpush2.msra.mxu0 0.0
  %794 = vmatprep.subr.mxu0 0.0
  %795 = vmatpush2.msra.mxu0 0.0
  %796 = vmatprep.subr.mxu0 0.0
  %797 = vmatpush2.msra.mxu0 0.0
  %798 = vmatprep.subr.mxu0 0.0
  %799 = vmatpush2.msra.mxu0 0.0
  %800 = vmatprep.subr.mxu0 0.0
  %801 = vmatpush2.msra.mxu0 0.0
  %802 = vmatprep.subr.mxu0 0.0
  %803 = vmatpush2.msra.mxu0 0.0
  %804 = vmatprep.subr.mxu0 0.0
  %805 = vmatpush2.msra.mxu0 0.0
  %806 = vmatprep.subr.mxu0 0.0
  %807 = vmatpush2.msra.mxu0 0.0
  %808 = vmatprep.subr.mxu0 0.0
  %809 = vmatpush2.msra.mxu0 0.0
  %810 = vmatprep.subr.mxu0 0.0
  %811 = vmatpush2.msra.mxu0 0.0
  %812 = vmatprep.subr.mxu0 0.0
  %813 = vmatpush2.msra.mxu0 0.0
  %814 = vmatprep.subr.mxu0 0.0
  %815 = vmatpush2.msra.mxu0 0.0
  %816 = vmatprep.subr.mxu0 0.0
  %817 = vmatpush2.msra.mxu0 0.0
  %818 = vmatprep.mubr.f32.mxu0 0.0
  %819 = vmatmul.mubr.f32.gmra.mxu0 %v749
  %v820 = vpop.f32.mrf.mxu0
  %v821 = vadd.f32 %v51, %v820
  %v822 = vpop.f32.mrf.mxu0
  %823 = vmatprep.mubr.f32.mxu0 0.0
  %824 = vmatmul.mubr.f32.gmra.mxu0 %v752
  %v825 = vpop.f32.mrf.mxu0
  %v826 = vadd.f32 %v51, %v825
  %v827 = vpop.f32.mrf.mxu0
  %828 = vdwg.mxu0
  %829 = vmatprep.subr.mxu0 0.0
  %830 = vmatpush1.msra.mxu0 %v45
  %831 = vmatprep.subr.mxu0 0.0
  %832 = vmatpush1.msra.mxu0 %v44
  %833 = vmatprep.subr.mxu0 0.0
  %834 = vmatpush1.msra.mxu0 %v43
  %835 = vmatprep.subr.mxu0 0.0
  %836 = vmatpush1.msra.mxu0 %v42
  %837 = vmatprep.subr.mxu0 0.0
  %838 = vmatpush1.msra.mxu0 %v41
  %839 = vmatprep.subr.mxu0 0.0
  %840 = vmatpush1.msra.mxu0 %v40
  %841 = vmatprep.subr.mxu0 0.0
  %842 = vmatpush1.msra.mxu0 %v39
  %843 = vmatprep.subr.mxu0 0.0
  %844 = vmatpush1.msra.mxu0 %v38
  %845 = vmatprep.subr.mxu0 0.0
  %846 = vmatpush1.msra.mxu0 %v37
  %847 = vmatprep.subr.mxu0 0.0
  %848 = vmatpush1.msra.mxu0 %v36
  %849 = vmatprep.subr.mxu0 0.0
  %850 = vmatpush1.msra.mxu0 %v35
  %851 = vmatprep.subr.mxu0 0.0
  %852 = vmatpush1.msra.mxu0 %v34
  %853 = vmatprep.subr.mxu0 0.0
  %854 = vmatpush1.msra.mxu0 %v33
  %855 = vmatprep.subr.mxu0 0.0
  %856 = vmatpush1.msra.mxu0 %v32
  %857 = vmatprep.subr.mxu0 0.0
  %858 = vmatpush1.msra.mxu0 %v31
  %859 = vmatprep.subr.mxu0 0.0
  %860 = vmatpush1.msra.mxu0 %v30
  %861 = vmatprep.subr.mxu0 0.0
  %862 = vmatpush2.msra.mxu0 0.0
  %863 = vmatprep.subr.mxu0 0.0
  %864 = vmatpush2.msra.mxu0 0.0
  %865 = vmatprep.subr.mxu0 0.0
  %866 = vmatpush2.msra.mxu0 0.0
  %867 = vmatprep.subr.mxu0 0.0
  %868 = vmatpush2.msra.mxu0 0.0
  %869 = vmatprep.subr.mxu0 0.0
  %870 = vmatpush2.msra.mxu0 0.0
  %871 = vmatprep.subr.mxu0 0.0
  %872 = vmatpush2.msra.mxu0 0.0
  %873 = vmatprep.subr.mxu0 0.0
  %874 = vmatpush2.msra.mxu0 0.0
  %875 = vmatprep.subr.mxu0 0.0
  %876 = vmatpush2.msra.mxu0 0.0
  %877 = vmatprep.subr.mxu0 0.0
  %878 = vmatpush2.msra.mxu0 0.0
  %879 = vmatprep.subr.mxu0 0.0
  %880 = vmatpush2.msra.mxu0 0.0
  %881 = vmatprep.subr.mxu0 0.0
  %882 = vmatpush2.msra.mxu0 0.0
  %883 = vmatprep.subr.mxu0 0.0
  %884 = vmatpush2.msra.mxu0 0.0
  %885 = vmatprep.subr.mxu0 0.0
  %886 = vmatpush2.msra.mxu0 0.0
  %887 = vmatprep.subr.mxu0 0.0
  %888 = vmatpush2.msra.mxu0 0.0
  %889 = vmatprep.subr.mxu0 0.0
  %890 = vmatpush2.msra.mxu0 0.0
  %891 = vmatprep.subr.mxu0 0.0
  %892 = vmatpush2.msra.mxu0 0.0
  %893 = vmatprep.mubr.f32.mxu0 0.0
  %894 = vmatmul.mubr.f32.gmra.mxu0 %v672
  %v895 = vpop.f32.mrf.mxu0
  %v896 = vadd.f32 0.0, %v895
  %v897 = vpop.f32.mrf.mxu0
  %898 = vdwg.mxu0
  %v899 = vadd.f32 %v821, %v896
  %v900 = vtanh.pop %v899
  %901 = vmatprep.subr.mxu0 0.0
  %902 = vmatpush1.msra.mxu0 %v45
  %903 = vmatprep.subr.mxu0 0.0
  %904 = vmatpush1.msra.mxu0 %v44
  %905 = vmatprep.subr.mxu0 0.0
  %906 = vmatpush1.msra.mxu0 %v43
  %907 = vmatprep.subr.mxu0 0.0
  %908 = vmatpush1.msra.mxu0 %v42
  %909 = vmatprep.subr.mxu0 0.0
  %910 = vmatpush1.msra.mxu0 %v41
  %911 = vmatprep.subr.mxu0 0.0
  %912 = vmatpush1.msra.mxu0 %v40
  %913 = vmatprep.subr.mxu0 0.0
  %914 = vmatpush1.msra.mxu0 %v39
  %915 = vmatprep.subr.mxu0 0.0
  %916 = vmatpush1.msra.mxu0 %v38
  %917 = vmatprep.subr.mxu0 0.0
  %918 = vmatpush1.msra.mxu0 %v37
  %919 = vmatprep.subr.mxu0 0.0
  %920 = vmatpush1.msra.mxu0 %v36
  %921 = vmatprep.subr.mxu0 0.0
  %922 = vmatpush1.msra.mxu0 %v35
  %923 = vmatprep.subr.mxu0 0.0
  %924 = vmatpush1.msra.mxu0 %v34
  %925 = vmatprep.subr.mxu0 0.0
  %926 = vmatpush1.msra.mxu0 %v33
  %927 = vmatprep.subr.mxu0 0.0
  %928 = vmatpush1.msra.mxu0 %v32
  %929 = vmatprep.subr.mxu0 0.0
  %930 = vmatpush1.msra.mxu0 %v31
  %931 = vmatprep.subr.mxu0 0.0
  %932 = vmatpush1.msra.mxu0 %v30
  %933 = vmatprep.subr.mxu0 0.0
  %934 = vmatpush2.msra.mxu0 0.0
  %935 = vmatprep.subr.mxu0 0.0
  %936 = vmatpush2.msra.mxu0 0.0
  %937 = vmatprep.subr.mxu0 0.0
  %938 = vmatpush2.msra.mxu0 0.0
  %939 = vmatprep.subr.mxu0 0.0
  %940 = vmatpush2.msra.mxu0 0.0
  %941 = vmatprep.subr.mxu0 0.0
  %942 = vmatpush2.msra.mxu0 0.0
  %943 = vmatprep.subr.mxu0 0.0
  %944 = vmatpush2.msra.mxu0 0.0
  %945 = vmatprep.subr.mxu0 0.0
  %946 = vmatpush2.msra.mxu0 0.0
  %947 = vmatprep.subr.mxu0 0.0
  %948 = vmatpush2.msra.mxu0 0.0
  %949 = vmatprep.subr.mxu0 0.0
  %950 = vmatpush2.msra.mxu0 0.0
  %951 = vmatprep.subr.mxu0 0.0
  %952 = vmatpush2.msra.mxu0 0.0
  %953 = vmatprep.subr.mxu0 0.0
  %954 = vmatpush2.msra.mxu0 0.0
  %955 = vmatprep.subr.mxu0 0.0
  %956 = vmatpush2.msra.mxu0 0.0
  %957 = vmatprep.subr.mxu0 0.0
  %958 = vmatpush2.msra.mxu0 0.0
  %959 = vmatprep.subr.mxu0 0.0
  %960 = vmatpush2.msra.mxu0 0.0
  %961 = vmatprep.subr.mxu0 0.0
  %962 = vmatpush2.msra.mxu0 0.0
  %963 = vmatprep.subr.mxu0 0.0
  %964 = vmatpush2.msra.mxu0 0.0
  %965 = vmatprep.mubr.f32.mxu0 0.0
  %966 = vmatmul.mubr.f32.gmra.mxu0 %v744
  %v967 = vpop.f32.mrf.mxu0
  %v968 = vadd.f32 0.0, %v967
  %v969 = vpop.f32.mrf.mxu0
  %970 = vdwg.mxu0
  %v971 = vadd.f32 %v826, %v968
  %v972 = vtanh.pop %v971
  %s973 = scalar_lea.vmem %s0, 64
  %v974 = vld [vmem:[%s973] sm:$0xff]
  %v975 = vld [vmem:[%s973 + $0x8] sm:$0xff]
  %v977 = vsel %vm63, %v974, 0
  %v980 = vsel %vm63, %v975, 0
  %982 = vmatprep.subr.mxu0 0.0
  %983 = vmatpush1.msra.mxu0 0.0
  %984 = vmatprep.subr.mxu0 0.0
  %985 = vmatpush1.msra.mxu0 0.0
  %986 = vmatprep.subr.mxu0 0.0
  %987 = vmatpush1.msra.mxu0 0.0
  %988 = vmatprep.subr.mxu0 0.0
  %989 = vmatpush1.msra.mxu0 0.0
  %990 = vmatprep.subr.mxu0 0.0
  %991 = vmatpush1.msra.mxu0 0.0
  %992 = vmatprep.subr.mxu0 0.0
  %993 = vmatpush1.msra.mxu0 0.0
  %994 = vmatprep.subr.mxu0 0.0
  %995 = vmatpush1.msra.mxu0 0.0
  %996 = vmatprep.subr.mxu0 0.0
  %997 = vmatpush1.msra.mxu0 0.0
  %998 = vmatprep.subr.mxu0 0.0
  %999 = vmatpush1.msra.mxu0 0.0
  %1000 = vmatprep.subr.mxu0 0.0
  %1001 = vmatpush1.msra.mxu0 0.0
  %1002 = vmatprep.subr.mxu0 0.0
  %1003 = vmatpush1.msra.mxu0 0.0
  %1004 = vmatprep.subr.mxu0 0.0
  %1005 = vmatpush1.msra.mxu0 0.0
  %1006 = vmatprep.subr.mxu0 0.0
  %1007 = vmatpush1.msra.mxu0 0.0
  %1008 = vmatprep.subr.mxu0 0.0
  %1009 = vmatpush1.msra.mxu0 0.0
  %1010 = vmatprep.subr.mxu0 0.0
  %1011 = vmatpush1.msra.mxu0 %v29
  %1012 = vmatprep.subr.mxu0 0.0
  %1013 = vmatpush1.msra.mxu0 %v28
  %1014 = vmatprep.subr.mxu0 0.0
  %1015 = vmatpush2.msra.mxu0 0.0
  %1016 = vmatprep.subr.mxu0 0.0
  %1017 = vmatpush2.msra.mxu0 0.0
  %1018 = vmatprep.subr.mxu0 0.0
  %1019 = vmatpush2.msra.mxu0 0.0
  %1020 = vmatprep.subr.mxu0 0.0
  %1021 = vmatpush2.msra.mxu0 0.0
  %1022 = vmatprep.subr.mxu0 0.0
  %1023 = vmatpush2.msra.mxu0 0.0
  %1024 = vmatprep.subr.mxu0 0.0
  %1025 = vmatpush2.msra.mxu0 0.0
  %1026 = vmatprep.subr.mxu0 0.0
  %1027 = vmatpush2.msra.mxu0 0.0
  %1028 = vmatprep.subr.mxu0 0.0
  %1029 = vmatpush2.msra.mxu0 0.0
  %1030 = vmatprep.subr.mxu0 0.0
  %1031 = vmatpush2.msra.mxu0 0.0
  %1032 = vmatprep.subr.mxu0 0.0
  %1033 = vmatpush2.msra.mxu0 0.0
  %1034 = vmatprep.subr.mxu0 0.0
  %1035 = vmatpush2.msra.mxu0 0.0
  %1036 = vmatprep.subr.mxu0 0.0
  %1037 = vmatpush2.msra.mxu0 0.0
  %1038 = vmatprep.subr.mxu0 0.0
  %1039 = vmatpush2.msra.mxu0 0.0
  %1040 = vmatprep.subr.mxu0 0.0
  %1041 = vmatpush2.msra.mxu0 0.0
  %1042 = vmatprep.subr.mxu0 0.0
  %1043 = vmatpush2.msra.mxu0 0.0
  %1044 = vmatprep.subr.mxu0 0.0
  %1045 = vmatpush2.msra.mxu0 0.0
  %1046 = vmatprep.mubr.f32.mxu0 0.0
  %1047 = vmatmul.mubr.f32.gmra.mxu0 %v977
  %v1048 = vpop.f32.mrf.mxu0
  %v1049 = vadd.f32 %v51, %v1048
  %v1050 = vpop.f32.mrf.mxu0
  %1051 = vmatprep.mubr.f32.mxu0 0.0
  %1052 = vmatmul.mubr.f32.gmra.mxu0 %v980
  %v1053 = vpop.f32.mrf.mxu0
  %v1054 = vadd.f32 %v51, %v1053
  %v1055 = vpop.f32.mrf.mxu0
  %1056 = vdwg.mxu0
  %1057 = vmatprep.subr.mxu0 0.0
  %1058 = vmatpush1.msra.mxu0 %v45
  %1059 = vmatprep.subr.mxu0 0.0
  %1060 = vmatpush1.msra.mxu0 %v44
  %1061 = vmatprep.subr.mxu0 0.0
  %1062 = vmatpush1.msra.mxu0 %v43
  %1063 = vmatprep.subr.mxu0 0.0
  %1064 = vmatpush1.msra.mxu0 %v42
  %1065 = vmatprep.subr.mxu0 0.0
  %1066 = vmatpush1.msra.mxu0 %v41
  %1067 = vmatprep.subr.mxu0 0.0
  %1068 = vmatpush1.msra.mxu0 %v40
  %1069 = vmatprep.subr.mxu0 0.0
  %1070 = vmatpush1.msra.mxu0 %v39
  %1071 = vmatprep.subr.mxu0 0.0
  %1072 = vmatpush1.msra.mxu0 %v38
  %1073 = vmatprep.subr.mxu0 0.0
  %1074 = vmatpush1.msra.mxu0 %v37
  %1075 = vmatprep.subr.mxu0 0.0
  %1076 = vmatpush1.msra.mxu0 %v36
  %1077 = vmatprep.subr.mxu0 0.0
  %1078 = vmatpush1.msra.mxu0 %v35
  %1079 = vmatprep.subr.mxu0 0.0
  %1080 = vmatpush1.msra.mxu0 %v34
  %1081 = vmatprep.subr.mxu0 0.0
  %1082 = vmatpush1.msra.mxu0 %v33
  %1083 = vmatprep.subr.mxu0 0.0
  %1084 = vmatpush1.msra.mxu0 %v32
  %1085 = vmatprep.subr.mxu0 0.0
  %1086 = vmatpush1.msra.mxu0 %v31
  %1087 = vmatprep.subr.mxu0 0.0
  %1088 = vmatpush1.msra.mxu0 %v30
  %1089 = vmatprep.subr.mxu0 0.0
  %1090 = vmatpush2.msra.mxu0 0.0
  %1091 = vmatprep.subr.mxu0 0.0
  %1092 = vmatpush2.msra.mxu0 0.0
  %1093 = vmatprep.subr.mxu0 0.0
  %1094 = vmatpush2.msra.mxu0 0.0
  %1095 = vmatprep.subr.mxu0 0.0
  %1096 = vmatpush2.msra.mxu0 0.0
  %1097 = vmatprep.subr.mxu0 0.0
  %1098 = vmatpush2.msra.mxu0 0.0
  %1099 = vmatprep.subr.mxu0 0.0
  %1100 = vmatpush2.msra.mxu0 0.0
  %1101 = vmatprep.subr.mxu0 0.0
  %1102 = vmatpush2.msra.mxu0 0.0
  %1103 = vmatprep.subr.mxu0 0.0
  %1104 = vmatpush2.msra.mxu0 0.0
  %1105 = vmatprep.subr.mxu0 0.0
  %1106 = vmatpush2.msra.mxu0 0.0
  %1107 = vmatprep.subr.mxu0 0.0
  %1108 = vmatpush2.msra.mxu0 0.0
  %1109 = vmatprep.subr.mxu0 0.0
  %1110 = vmatpush2.msra.mxu0 0.0
  %1111 = vmatprep.subr.mxu0 0.0
  %1112 = vmatpush2.msra.mxu0 0.0
  %1113 = vmatprep.subr.mxu0 0.0
  %1114 = vmatpush2.msra.mxu0 0.0
  %1115 = vmatprep.subr.mxu0 0.0
  %1116 = vmatpush2.msra.mxu0 0.0
  %1117 = vmatprep.subr.mxu0 0.0
  %1118 = vmatpush2.msra.mxu0 0.0
  %1119 = vmatprep.subr.mxu0 0.0
  %1120 = vmatpush2.msra.mxu0 0.0
  %1121 = vmatprep.mubr.f32.mxu0 0.0
  %1122 = vmatmul.mubr.f32.gmra.mxu0 %v900
  %v1123 = vpop.f32.mrf.mxu0
  %v1124 = vadd.f32 0.0, %v1123
  %v1125 = vpop.f32.mrf.mxu0
  %1126 = vdwg.mxu0
  %v1127 = vadd.f32 %v1049, %v1124
  %v1128 = vtanh.pop %v1127
  %1129 = vmatprep.subr.mxu0 0.0
  %1130 = vmatpush1.msra.mxu0 %v45
  %1131 = vmatprep.subr.mxu0 0.0
  %1132 = vmatpush1.msra.mxu0 %v44
  %1133 = vmatprep.subr.mxu0 0.0
  %1134 = vmatpush1.msra.mxu0 %v43
  %1135 = vmatprep.subr.mxu0 0.0
  %1136 = vmatpush1.msra.mxu0 %v42
  %1137 = vmatprep.subr.mxu0 0.0
  %1138 = vmatpush1.msra.mxu0 %v41
  %1139 = vmatprep.subr.mxu0 0.0
  %1140 = vmatpush1.msra.mxu0 %v40
  %1141 = vmatprep.subr.mxu0 0.0
  %1142 = vmatpush1.msra.mxu0 %v39
  %1143 = vmatprep.subr.mxu0 0.0
  %1144 = vmatpush1.msra.mxu0 %v38
  %1145 = vmatprep.subr.mxu0 0.0
  %1146 = vmatpush1.msra.mxu0 %v37
  %1147 = vmatprep.subr.mxu0 0.0
  %1148 = vmatpush1.msra.mxu0 %v36
  %1149 = vmatprep.subr.mxu0 0.0
  %1150 = vmatpush1.msra.mxu0 %v35
  %1151 = vmatprep.subr.mxu0 0.0
  %1152 = vmatpush1.msra.mxu0 %v34
  %1153 = vmatprep.subr.mxu0 0.0
  %1154 = vmatpush1.msra.mxu0 %v33
  %1155 = vmatprep.subr.mxu0 0.0
  %1156 = vmatpush1.msra.mxu0 %v32
  %1157 = vmatprep.subr.mxu0 0.0
  %1158 = vmatpush1.msra.mxu0 %v31
  %1159 = vmatprep.subr.mxu0 0.0
  %1160 = vmatpush1.msra.mxu0 %v30
  %1161 = vmatprep.subr.mxu0 0.0
  %1162 = vmatpush2.msra.mxu0 0.0
  %1163 = vmatprep.subr.mxu0 0.0
  %1164 = vmatpush2.msra.mxu0 0.0
  %1165 = vmatprep.subr.mxu0 0.0
  %1166 = vmatpush2.msra.mxu0 0.0
  %1167 = vmatprep.subr.mxu0 0.0
  %1168 = vmatpush2.msra.mxu0 0.0
  %1169 = vmatprep.subr.mxu0 0.0
  %1170 = vmatpush2.msra.mxu0 0.0
  %1171 = vmatprep.subr.mxu0 0.0
  %1172 = vmatpush2.msra.mxu0 0.0
  %1173 = vmatprep.subr.mxu0 0.0
  %1174 = vmatpush2.msra.mxu0 0.0
  %1175 = vmatprep.subr.mxu0 0.0
  %1176 = vmatpush2.msra.mxu0 0.0
  %1177 = vmatprep.subr.mxu0 0.0
  %1178 = vmatpush2.msra.mxu0 0.0
  %1179 = vmatprep.subr.mxu0 0.0
  %1180 = vmatpush2.msra.mxu0 0.0
  %1181 = vmatprep.subr.mxu0 0.0
  %1182 = vmatpush2.msra.mxu0 0.0
  %1183 = vmatprep.subr.mxu0 0.0
  %1184 = vmatpush2.msra.mxu0 0.0
  %1185 = vmatprep.subr.mxu0 0.0
  %1186 = vmatpush2.msra.mxu0 0.0
  %1187 = vmatprep.subr.mxu0 0.0
  %1188 = vmatpush2.msra.mxu0 0.0
  %1189 = vmatprep.subr.mxu0 0.0
  %1190 = vmatpush2.msra.mxu0 0.0
  %1191 = vmatprep.subr.mxu0 0.0
  %1192 = vmatpush2.msra.mxu0 0.0
  %1193 = vmatprep.mubr.f32.mxu0 0.0
  %1194 = vmatmul.mubr.f32.gmra.mxu0 %v972
  %v1195 = vpop.f32.mrf.mxu0
  %v1196 = vadd.f32 0.0, %v1195
  %v1197 = vpop.f32.mrf.mxu0
  %1198 = vdwg.mxu0
  %v1199 = vadd.f32 %v1054, %v1196
  %v1200 = vtanh.pop %v1199
  %s1201 = scalar_lea.vmem %s0, 80
  %v1202 = vld [vmem:[%s1201] sm:$0xff]
  %v1203 = vld [vmem:[%s1201 + $0x8] sm:$0xff]
  %v1205 = vsel %vm63, %v1202, 0
  %v1208 = vsel %vm63, %v1203, 0
  %1210 = vmatprep.subr.mxu0 0.0
  %1211 = vmatpush1.msra.mxu0 0.0
  %1212 = vmatprep.subr.mxu0 0.0
  %1213 = vmatpush1.msra.mxu0 0.0
  %1214 = vmatprep.subr.mxu0 0.0
  %1215 = vmatpush1.msra.mxu0 0.0
  %1216 = vmatprep.subr.mxu0 0.0
  %1217 = vmatpush1.msra.mxu0 0.0
  %1218 = vmatprep.subr.mxu0 0.0
  %1219 = vmatpush1.msra.mxu0 0.0
  %1220 = vmatprep.subr.mxu0 0.0
  %1221 = vmatpush1.msra.mxu0 0.0
  %1222 = vmatprep.subr.mxu0 0.0
  %1223 = vmatpush1.msra.mxu0 0.0
  %1224 = vmatprep.subr.mxu0 0.0
  %1225 = vmatpush1.msra.mxu0 0.0
  %1226 = vmatprep.subr.mxu0 0.0
  %1227 = vmatpush1.msra.mxu0 0.0
  %1228 = vmatprep.subr.mxu0 0.0
  %1229 = vmatpush1.msra.mxu0 0.0
  %1230 = vmatprep.subr.mxu0 0.0
  %1231 = vmatpush1.msra.mxu0 0.0
  %1232 = vmatprep.subr.mxu0 0.0
  %1233 = vmatpush1.msra.mxu0 0.0
  %1234 = vmatprep.subr.mxu0 0.0
  %1235 = vmatpush1.msra.mxu0 0.0
  %1236 = vmatprep.subr.mxu0 0.0
  %1237 = vmatpush1.msra.mxu0 0.0
  %1238 = vmatprep.subr.mxu0 0.0
  %1239 = vmatpush1.msra.mxu0 %v29
  %1240 = vmatprep.subr.mxu0 0.0
  %1241 = vmatpush1.msra.mxu0 %v28
  %1242 = vmatprep.subr.mxu0 0.0
  %1243 = vmatpush2.msra.mxu0 0.0
  %1244 = vmatprep.subr.mxu0 0.0
  %1245 = vmatpush2.msra.mxu0 0.0
  %1246 = vmatprep.subr.mxu0 0.0
  %1247 = vmatpush2.msra.mxu0 0.0
  %1248 = vmatprep.subr.mxu0 0.0
  %1249 = vmatpush2.msra.mxu0 0.0
  %1250 = vmatprep.subr.mxu0 0.0
  %1251 = vmatpush2.msra.mxu0 0.0
  %1252 = vmatprep.subr.mxu0 0.0
  %1253 = vmatpush2.msra.mxu0 0.0
  %1254 = vmatprep.subr.mxu0 0.0
  %1255 = vmatpush2.msra.mxu0 0.0
  %1256 = vmatprep.subr.mxu0 0.0
  %1257 = vmatpush2.msra.mxu0 0.0
  %1258 = vmatprep.subr.mxu0 0.0
  %1259 = vmatpush2.msra.mxu0 0.0
  %1260 = vmatprep.subr.mxu0 0.0
  %1261 = vmatpush2.msra.mxu0 0.0
  %1262 = vmatprep.subr.mxu0 0.0
  %1263 = vmatpush2.msra.mxu0 0.0
  %1264 = vmatprep.subr.mxu0 0.0
  %1265 = vmatpush2.msra.mxu0 0.0
  %1266 = vmatprep.subr.mxu0 0.0
  %1267 = vmatpush2.msra.mxu0 0.0
  %1268 = vmatprep.subr.mxu0 0.0
  %1269 = vmatpush2.msra.mxu0 0.0
  %1270 = vmatprep.subr.mxu0 0.0
  %1271 = vmatpush2.msra.mxu0 0.0
  %1272 = vmatprep.subr.mxu0 0.0
  %1273 = vmatpush2.msra.mxu0 0.0
  %1274 = vmatprep.mubr.f32.mxu0 0.0
  %1275 = vmatmul.mubr.f32.gmra.mxu0 %v1205
  %v1276 = vpop.f32.mrf.mxu0
  %v1277 = vadd.f32 %v51, %v1276
  %v1278 = vpop.f32.mrf.mxu0
  %1279 = vmatprep.mubr.f32.mxu0 0.0
  %1280 = vmatmul.mubr.f32.gmra.mxu0 %v1208
  %v1281 = vpop.f32.mrf.mxu0
  %v1282 = vadd.f32 %v51, %v1281
  %v1283 = vpop.f32.mrf.mxu0
  %1284 = vdwg.mxu0
  %1285 = vmatprep.subr.mxu0 0.0
  %1286 = vmatpush1.msra.mxu0 %v45
  %1287 = vmatprep.subr.mxu0 0.0
  %1288 = vmatpush1.msra.mxu0 %v44
  %1289 = vmatprep.subr.mxu0 0.0
  %1290 = vmatpush1.msra.mxu0 %v43
  %1291 = vmatprep.subr.mxu0 0.0
  %1292 = vmatpush1.msra.mxu0 %v42
  %1293 = vmatprep.subr.mxu0 0.0
  %1294 = vmatpush1.msra.mxu0 %v41
  %1295 = vmatprep.subr.mxu0 0.0
  %1296 = vmatpush1.msra.mxu0 %v40
  %1297 = vmatprep.subr.mxu0 0.0
  %1298 = vmatpush1.msra.mxu0 %v39
  %1299 = vmatprep.subr.mxu0 0.0
  %1300 = vmatpush1.msra.mxu0 %v38
  %1301 = vmatprep.subr.mxu0 0.0
  %1302 = vmatpush1.msra.mxu0 %v37
  %1303 = vmatprep.subr.mxu0 0.0
  %1304 = vmatpush1.msra.mxu0 %v36
  %1305 = vmatprep.subr.mxu0 0.0
  %1306 = vmatpush1.msra.mxu0 %v35
  %1307 = vmatprep.subr.mxu0 0.0
  %1308 = vmatpush1.msra.mxu0 %v34
  %1309 = vmatprep.subr.mxu0 0.0
  %1310 = vmatpush1.msra.mxu0 %v33
  %1311 = vmatprep.subr.mxu0 0.0
  %1312 = vmatpush1.msra.mxu0 %v32
  %1313 = vmatprep.subr.mxu0 0.0
  %1314 = vmatpush1.msra.mxu0 %v31
  %1315 = vmatprep.subr.mxu0 0.0
  %1316 = vmatpush1.msra.mxu0 %v30
  %1317 = vmatprep.subr.mxu0 0.0
  %1318 = vmatpush2.msra.mxu0 0.0
  %1319 = vmatprep.subr.mxu0 0.0
  %1320 = vmatpush2.msra.mxu0 0.0
  %1321 = vmatprep.subr.mxu0 0.0
  %1322 = vmatpush2.msra.mxu0 0.0
  %1323 = vmatprep.subr.mxu0 0.0
  %1324 = vmatpush2.msra.mxu0 0.0
  %1325 = vmatprep.subr.mxu0 0.0
  %1326 = vmatpush2.msra.mxu0 0.0
  %1327 = vmatprep.subr.mxu0 0.0
  %1328 = vmatpush2.msra.mxu0 0.0
  %1329 = vmatprep.subr.mxu0 0.0
  %1330 = vmatpush2.msra.mxu0 0.0
  %1331 = vmatprep.subr.mxu0 0.0
  %1332 = vmatpush2.msra.mxu0 0.0
  %1333 = vmatprep.subr.mxu0 0.0
  %1334 = vmatpush2.msra.mxu0 0.0
  %1335 = vmatprep.subr.mxu0 0.0
  %1336 = vmatpush2.msra.mxu0 0.0
  %1337 = vmatprep.subr.mxu0 0.0
  %1338 = vmatpush2.msra.mxu0 0.0
  %1339 = vmatprep.subr.mxu0 0.0
  %1340 = vmatpush2.msra.mxu0 0.0
  %1341 = vmatprep.subr.mxu0 0.0
  %1342 = vmatpush2.msra.mxu0 0.0
  %1343 = vmatprep.subr.mxu0 0.0
  %1344 = vmatpush2.msra.mxu0 0.0
  %1345 = vmatprep.subr.mxu0 0.0
  %1346 = vmatpush2.msra.mxu0 0.0
  %1347 = vmatprep.subr.mxu0 0.0
  %1348 = vmatpush2.msra.mxu0 0.0
  %1349 = vmatprep.mubr.f32.mxu0 0.0
  %1350 = vmatmul.mubr.f32.gmra.mxu0 %v1128
  %v1351 = vpop.f32.mrf.mxu0
  %v1352 = vadd.f32 0.0, %v1351
  %v1353 = vpop.f32.mrf.mxu0
  %1354 = vdwg.mxu0
  %v1355 = vadd.f32 %v1277, %v1352
  %v1356 = vtanh.pop %v1355
  %1357 = vmatprep.subr.mxu0 0.0
  %1358 = vmatpush1.msra.mxu0 %v45
  %1359 = vmatprep.subr.mxu0 0.0
  %1360 = vmatpush1.msra.mxu0 %v44
  %1361 = vmatprep.subr.mxu0 0.0
  %1362 = vmatpush1.msra.mxu0 %v43
  %1363 = vmatprep.subr.mxu0 0.0
  %1364 = vmatpush1.msra.mxu0 %v42
  %1365 = vmatprep.subr.mxu0 0.0
  %1366 = vmatpush1.msra.mxu0 %v41
  %1367 = vmatprep.subr.mxu0 0.0
  %1368 = vmatpush1.msra.mxu0 %v40
  %1369 = vmatprep.subr.mxu0 0.0
  %1370 = vmatpush1.msra.mxu0 %v39
  %1371 = vmatprep.subr.mxu0 0.0
  %1372 = vmatpush1.msra.mxu0 %v38
  %1373 = vmatprep.subr.mxu0 0.0
  %1374 = vmatpush1.msra.mxu0 %v37
  %1375 = vmatprep.subr.mxu0 0.0
  %1376 = vmatpush1.msra.mxu0 %v36
  %1377 = vmatprep.subr.mxu0 0.0
  %1378 = vmatpush1.msra.mxu0 %v35
  %1379 = vmatprep.subr.mxu0 0.0
  %1380 = vmatpush1.msra.mxu0 %v34
  %1381 = vmatprep.subr.mxu0 0.0
  %1382 = vmatpush1.msra.mxu0 %v33
  %1383 = vmatprep.subr.mxu0 0.0
  %1384 = vmatpush1.msra.mxu0 %v32
  %1385 = vmatprep.subr.mxu0 0.0
  %1386 = vmatpush1.msra.mxu0 %v31
  %1387 = vmatprep.subr.mxu0 0.0
  %1388 = vmatpush1.msra.mxu0 %v30
  %1389 = vmatprep.subr.mxu0 0.0
  %1390 = vmatpush2.msra.mxu0 0.0
  %1391 = vmatprep.subr.mxu0 0.0
  %1392 = vmatpush2.msra.mxu0 0.0
  %1393 = vmatprep.subr.mxu0 0.0
  %1394 = vmatpush2.msra.mxu0 0.0
  %1395 = vmatprep.subr.mxu0 0.0
  %1396 = vmatpush2.msra.mxu0 0.0
  %1397 = vmatprep.subr.mxu0 0.0
  %1398 = vmatpush2.msra.mxu0 0.0
  %1399 = vmatprep.subr.mxu0 0.0
  %1400 = vmatpush2.msra.mxu0 0.0
  %1401 = vmatprep.subr.mxu0 0.0
  %1402 = vmatpush2.msra.mxu0 0.0
  %1403 = vmatprep.subr.mxu0 0.0
  %1404 = vmatpush2.msra.mxu0 0.0
  %1405 = vmatprep.subr.mxu0 0.0
  %1406 = vmatpush2.msra.mxu0 0.0
  %1407 = vmatprep.subr.mxu0 0.0
  %1408 = vmatpush2.msra.mxu0 0.0
  %1409 = vmatprep.subr.mxu0 0.0
  %1410 = vmatpush2.msra.mxu0 0.0
  %1411 = vmatprep.subr.mxu0 0.0
  %1412 = vmatpush2.msra.mxu0 0.0
  %1413 = vmatprep.subr.mxu0 0.0
  %1414 = vmatpush2.msra.mxu0 0.0
  %1415 = vmatprep.subr.mxu0 0.0
  %1416 = vmatpush2.msra.mxu0 0.0
  %1417 = vmatprep.subr.mxu0 0.0
  %1418 = vmatpush2.msra.mxu0 0.0
  %1419 = vmatprep.subr.mxu0 0.0
  %1420 = vmatpush2.msra.mxu0 0.0
  %1421 = vmatprep.mubr.f32.mxu0 0.0
  %1422 = vmatmul.mubr.f32.gmra.mxu0 %v1200
  %v1423 = vpop.f32.mrf.mxu0
  %v1424 = vadd.f32 0.0, %v1423
  %v1425 = vpop.f32.mrf.mxu0
  %1426 = vdwg.mxu0
  %v1427 = vadd.f32 %v1282, %v1424
  %v1428 = vtanh.pop %v1427
  %s1429 = scalar_lea.vmem %s0, 96
  %v1430 = vld [vmem:[%s1429] sm:$0xff]
  %v1431 = vld [vmem:[%s1429 + $0x8] sm:$0xff]
  %v1433 = vsel %vm63, %v1430, 0
  %v1436 = vsel %vm63, %v1431, 0
  %1438 = vmatprep.subr.mxu0 0.0
  %1439 = vmatpush1.msra.mxu0 0.0
  %1440 = vmatprep.subr.mxu0 0.0
  %1441 = vmatpush1.msra.mxu0 0.0
  %1442 = vmatprep.subr.mxu0 0.0
  %1443 = vmatpush1.msra.mxu0 0.0
  %1444 = vmatprep.subr.mxu0 0.0
  %1445 = vmatpush1.msra.mxu0 0.0
  %1446 = vmatprep.subr.mxu0 0.0
  %1447 = vmatpush1.msra.mxu0 0.0
  %1448 = vmatprep.subr.mxu0 0.0
  %1449 = vmatpush1.msra.mxu0 0.0
  %1450 = vmatprep.subr.mxu0 0.0
  %1451 = vmatpush1.msra.mxu0 0.0
  %1452 = vmatprep.subr.mxu0 0.0
  %1453 = vmatpush1.msra.mxu0 0.0
  %1454 = vmatprep.subr.mxu0 0.0
  %1455 = vmatpush1.msra.mxu0 0.0
  %1456 = vmatprep.subr.mxu0 0.0
  %1457 = vmatpush1.msra.mxu0 0.0
  %1458 = vmatprep.subr.mxu0 0.0
  %1459 = vmatpush1.msra.mxu0 0.0
  %1460 = vmatprep.subr.mxu0 0.0
  %1461 = vmatpush1.msra.mxu0 0.0
  %1462 = vmatprep.subr.mxu0 0.0
  %1463 = vmatpush1.msra.mxu0 0.0
  %1464 = vmatprep.subr.mxu0 0.0
  %1465 = vmatpush1.msra.mxu0 0.0
  %1466 = vmatprep.subr.mxu0 0.0
  %1467 = vmatpush1.msra.mxu0 %v29
  %1468 = vmatprep.subr.mxu0 0.0
  %1469 = vmatpush1.msra.mxu0 %v28
  %1470 = vmatprep.subr.mxu0 0.0
  %1471 = vmatpush2.msra.mxu0 0.0
  %1472 = vmatprep.subr.mxu0 0.0
  %1473 = vmatpush2.msra.mxu0 0.0
  %1474 = vmatprep.subr.mxu0 0.0
  %1475 = vmatpush2.msra.mxu0 0.0
  %1476 = vmatprep.subr.mxu0 0.0
  %1477 = vmatpush2.msra.mxu0 0.0
  %1478 = vmatprep.subr.mxu0 0.0
  %1479 = vmatpush2.msra.mxu0 0.0
  %1480 = vmatprep.subr.mxu0 0.0
  %1481 = vmatpush2.msra.mxu0 0.0
  %1482 = vmatprep.subr.mxu0 0.0
  %1483 = vmatpush2.msra.mxu0 0.0
  %1484 = vmatprep.subr.mxu0 0.0
  %1485 = vmatpush2.msra.mxu0 0.0
  %1486 = vmatprep.subr.mxu0 0.0
  %1487 = vmatpush2.msra.mxu0 0.0
  %1488 = vmatprep.subr.mxu0 0.0
  %1489 = vmatpush2.msra.mxu0 0.0
  %1490 = vmatprep.subr.mxu0 0.0
  %1491 = vmatpush2.msra.mxu0 0.0
  %1492 = vmatprep.subr.mxu0 0.0
  %1493 = vmatpush2.msra.mxu0 0.0
  %1494 = vmatprep.subr.mxu0 0.0
  %1495 = vmatpush2.msra.mxu0 0.0
  %1496 = vmatprep.subr.mxu0 0.0
  %1497 = vmatpush2.msra.mxu0 0.0
  %1498 = vmatprep.subr.mxu0 0.0
  %1499 = vmatpush2.msra.mxu0 0.0
  %1500 = vmatprep.subr.mxu0 0.0
  %1501 = vmatpush2.msra.mxu0 0.0
  %1502 = vmatprep.mubr.f32.mxu0 0.0
  %1503 = vmatmul.mubr.f32.gmra.mxu0 %v1433
  %v1504 = vpop.f32.mrf.mxu0
  %v1505 = vadd.f32 %v51, %v1504
  %v1506 = vpop.f32.mrf.mxu0
  %1507 = vmatprep.mubr.f32.mxu0 0.0
  %1508 = vmatmul.mubr.f32.gmra.mxu0 %v1436
  %v1509 = vpop.f32.mrf.mxu0
  %v1510 = vadd.f32 %v51, %v1509
  %v1511 = vpop.f32.mrf.mxu0
  %1512 = vdwg.mxu0
  %1513 = vmatprep.subr.mxu0 0.0
  %1514 = vmatpush1.msra.mxu0 %v45
  %1515 = vmatprep.subr.mxu0 0.0
  %1516 = vmatpush1.msra.mxu0 %v44
  %1517 = vmatprep.subr.mxu0 0.0
  %1518 = vmatpush1.msra.mxu0 %v43
  %1519 = vmatprep.subr.mxu0 0.0
  %1520 = vmatpush1.msra.mxu0 %v42
  %1521 = vmatprep.subr.mxu0 0.0
  %1522 = vmatpush1.msra.mxu0 %v41
  %1523 = vmatprep.subr.mxu0 0.0
  %1524 = vmatpush1.msra.mxu0 %v40
  %1525 = vmatprep.subr.mxu0 0.0
  %1526 = vmatpush1.msra.mxu0 %v39
  %1527 = vmatprep.subr.mxu0 0.0
  %1528 = vmatpush1.msra.mxu0 %v38
  %1529 = vmatprep.subr.mxu0 0.0
  %1530 = vmatpush1.msra.mxu0 %v37
  %1531 = vmatprep.subr.mxu0 0.0
  %1532 = vmatpush1.msra.mxu0 %v36
  %1533 = vmatprep.subr.mxu0 0.0
  %1534 = vmatpush1.msra.mxu0 %v35
  %1535 = vmatprep.subr.mxu0 0.0
  %1536 = vmatpush1.msra.mxu0 %v34
  %1537 = vmatprep.subr.mxu0 0.0
  %1538 = vmatpush1.msra.mxu0 %v33
  %1539 = vmatprep.subr.mxu0 0.0
  %1540 = vmatpush1.msra.mxu0 %v32
  %1541 = vmatprep.subr.mxu0 0.0
  %1542 = vmatpush1.msra.mxu0 %v31
  %1543 = vmatprep.subr.mxu0 0.0
  %1544 = vmatpush1.msra.mxu0 %v30
  %1545 = vmatprep.subr.mxu0 0.0
  %1546 = vmatpush2.msra.mxu0 0.0
  %1547 = vmatprep.subr.mxu0 0.0
  %1548 = vmatpush2.msra.mxu0 0.0
  %1549 = vmatprep.subr.mxu0 0.0
  %1550 = vmatpush2.msra.mxu0 0.0
  %1551 = vmatprep.subr.mxu0 0.0
  %1552 = vmatpush2.msra.mxu0 0.0
  %1553 = vmatprep.subr.mxu0 0.0
  %1554 = vmatpush2.msra.mxu0 0.0
  %1555 = vmatprep.subr.mxu0 0.0
  %1556 = vmatpush2.msra.mxu0 0.0
  %1557 = vmatprep.subr.mxu0 0.0
  %1558 = vmatpush2.msra.mxu0 0.0
  %1559 = vmatprep.subr.mxu0 0.0
  %1560 = vmatpush2.msra.mxu0 0.0
  %1561 = vmatprep.subr.mxu0 0.0
  %1562 = vmatpush2.msra.mxu0 0.0
  %1563 = vmatprep.subr.mxu0 0.0
  %1564 = vmatpush2.msra.mxu0 0.0
  %1565 = vmatprep.subr.mxu0 0.0
  %1566 = vmatpush2.msra.mxu0 0.0
  %1567 = vmatprep.subr.mxu0 0.0
  %1568 = vmatpush2.msra.mxu0 0.0
  %1569 = vmatprep.subr.mxu0 0.0
  %1570 = vmatpush2.msra.mxu0 0.0
  %1571 = vmatprep.subr.mxu0 0.0
  %1572 = vmatpush2.msra.mxu0 0.0
  %1573 = vmatprep.subr.mxu0 0.0
  %1574 = vmatpush2.msra.mxu0 0.0
  %1575 = vmatprep.subr.mxu0 0.0
  %1576 = vmatpush2.msra.mxu0 0.0
  %1577 = vmatprep.mubr.f32.mxu0 0.0
  %1578 = vmatmul.mubr.f32.gmra.mxu0 %v1356
  %v1579 = vpop.f32.mrf.mxu0
  %v1580 = vadd.f32 0.0, %v1579
  %v1581 = vpop.f32.mrf.mxu0
  %1582 = vdwg.mxu0
  %v1583 = vadd.f32 %v1505, %v1580
  %v1584 = vtanh.pop %v1583
  %1585 = vmatprep.subr.mxu0 0.0
  %1586 = vmatpush1.msra.mxu0 %v45
  %1587 = vmatprep.subr.mxu0 0.0
  %1588 = vmatpush1.msra.mxu0 %v44
  %1589 = vmatprep.subr.mxu0 0.0
  %1590 = vmatpush1.msra.mxu0 %v43
  %1591 = vmatprep.subr.mxu0 0.0
  %1592 = vmatpush1.msra.mxu0 %v42
  %1593 = vmatprep.subr.mxu0 0.0
  %1594 = vmatpush1.msra.mxu0 %v41
  %1595 = vmatprep.subr.mxu0 0.0
  %1596 = vmatpush1.msra.mxu0 %v40
  %1597 = vmatprep.subr.mxu0 0.0
  %1598 = vmatpush1.msra.mxu0 %v39
  %1599 = vmatprep.subr.mxu0 0.0
  %1600 = vmatpush1.msra.mxu0 %v38
  %1601 = vmatprep.subr.mxu0 0.0
  %1602 = vmatpush1.msra.mxu0 %v37
  %1603 = vmatprep.subr.mxu0 0.0
  %1604 = vmatpush1.msra.mxu0 %v36
  %1605 = vmatprep.subr.mxu0 0.0
  %1606 = vmatpush1.msra.mxu0 %v35
  %1607 = vmatprep.subr.mxu0 0.0
  %1608 = vmatpush1.msra.mxu0 %v34
  %1609 = vmatprep.subr.mxu0 0.0
  %1610 = vmatpush1.msra.mxu0 %v33
  %1611 = vmatprep.subr.mxu0 0.0
  %1612 = vmatpush1.msra.mxu0 %v32
  %1613 = vmatprep.subr.mxu0 0.0
  %1614 = vmatpush1.msra.mxu0 %v31
  %1615 = vmatprep.subr.mxu0 0.0
  %1616 = vmatpush1.msra.mxu0 %v30
  %1617 = vmatprep.subr.mxu0 0.0
  %1618 = vmatpush2.msra.mxu0 0.0
  %1619 = vmatprep.subr.mxu0 0.0
  %1620 = vmatpush2.msra.mxu0 0.0
  %1621 = vmatprep.subr.mxu0 0.0
  %1622 = vmatpush2.msra.mxu0 0.0
  %1623 = vmatprep.subr.mxu0 0.0
  %1624 = vmatpush2.msra.mxu0 0.0
  %1625 = vmatprep.subr.mxu0 0.0
  %1626 = vmatpush2.msra.mxu0 0.0
  %1627 = vmatprep.subr.mxu0 0.0
  %1628 = vmatpush2.msra.mxu0 0.0
  %1629 = vmatprep.subr.mxu0 0.0
  %1630 = vmatpush2.msra.mxu0 0.0
  %1631 = vmatprep.subr.mxu0 0.0
  %1632 = vmatpush2.msra.mxu0 0.0
  %1633 = vmatprep.subr.mxu0 0.0
  %1634 = vmatpush2.msra.mxu0 0.0
  %1635 = vmatprep.subr.mxu0 0.0
  %1636 = vmatpush2.msra.mxu0 0.0
  %1637 = vmatprep.subr.mxu0 0.0
  %1638 = vmatpush2.msra.mxu0 0.0
  %1639 = vmatprep.subr.mxu0 0.0
  %1640 = vmatpush2.msra.mxu0 0.0
  %1641 = vmatprep.subr.mxu0 0.0
  %1642 = vmatpush2.msra.mxu0 0.0
  %1643 = vmatprep.subr.mxu0 0.0
  %1644 = vmatpush2.msra.mxu0 0.0
  %1645 = vmatprep.subr.mxu0 0.0
  %1646 = vmatpush2.msra.mxu0 0.0
  %1647 = vmatprep.subr.mxu0 0.0
  %1648 = vmatpush2.msra.mxu0 0.0
  %1649 = vmatprep.mubr.f32.mxu0 0.0
  %1650 = vmatmul.mubr.f32.gmra.mxu0 %v1428
  %v1651 = vpop.f32.mrf.mxu0
  %v1652 = vadd.f32 0.0, %v1651
  %v1653 = vpop.f32.mrf.mxu0
  %1654 = vdwg.mxu0
  %v1655 = vadd.f32 %v1510, %v1652
  %v1656 = vtanh.pop %v1655
  %s1657 = scalar_lea.vmem %s0, 112
  %v1658 = vld [vmem:[%s1657] sm:$0xff]
  %v1659 = vld [vmem:[%s1657 + $0x8] sm:$0xff]
  %v1661 = vsel %vm63, %v1658, 0
  %v1664 = vsel %vm63, %v1659, 0
  %1666 = vmatprep.subr.mxu0 0.0
  %1667 = vmatpush1.msra.mxu0 0.0
  %1668 = vmatprep.subr.mxu0 0.0
  %1669 = vmatpush1.msra.mxu0 0.0
  %1670 = vmatprep.subr.mxu0 0.0
  %1671 = vmatpush1.msra.mxu0 0.0
  %1672 = vmatprep.subr.mxu0 0.0
  %1673 = vmatpush1.msra.mxu0 0.0
  %1674 = vmatprep.subr.mxu0 0.0
  %1675 = vmatpush1.msra.mxu0 0.0
  %1676 = vmatprep.subr.mxu0 0.0
  %1677 = vmatpush1.msra.mxu0 0.0
  %1678 = vmatprep.subr.mxu0 0.0
  %1679 = vmatpush1.msra.mxu0 0.0
  %1680 = vmatprep.subr.mxu0 0.0
  %1681 = vmatpush1.msra.mxu0 0.0
  %1682 = vmatprep.subr.mxu0 0.0
  %1683 = vmatpush1.msra.mxu0 0.0
  %1684 = vmatprep.subr.mxu0 0.0
  %1685 = vmatpush1.msra.mxu0 0.0
  %1686 = vmatprep.subr.mxu0 0.0
  %1687 = vmatpush1.msra.mxu0 0.0
  %1688 = vmatprep.subr.mxu0 0.0
  %1689 = vmatpush1.msra.mxu0 0.0
  %1690 = vmatprep.subr.mxu0 0.0
  %1691 = vmatpush1.msra.mxu0 0.0
  %1692 = vmatprep.subr.mxu0 0.0
  %1693 = vmatpush1.msra.mxu0 0.0
  %1694 = vmatprep.subr.mxu0 0.0
  %1695 = vmatpush1.msra.mxu0 %v29
  %1696 = vmatprep.subr.mxu0 0.0
  %1697 = vmatpush1.msra.mxu0 %v28
  %1698 = vmatprep.subr.mxu0 0.0
  %1699 = vmatpush2.msra.mxu0 0.0
  %1700 = vmatprep.subr.mxu0 0.0
  %1701 = vmatpush2.msra.mxu0 0.0
  %1702 = vmatprep.subr.mxu0 0.0
  %1703 = vmatpush2.msra.mxu0 0.0
  %1704 = vmatprep.subr.mxu0 0.0
  %1705 = vmatpush2.msra.mxu0 0.0
  %1706 = vmatprep.subr.mxu0 0.0
  %1707 = vmatpush2.msra.mxu0 0.0
  %1708 = vmatprep.subr.mxu0 0.0
  %1709 = vmatpush2.msra.mxu0 0.0
  %1710 = vmatprep.subr.mxu0 0.0
  %1711 = vmatpush2.msra.mxu0 0.0
  %1712 = vmatprep.subr.mxu0 0.0
  %1713 = vmatpush2.msra.mxu0 0.0
  %1714 = vmatprep.subr.mxu0 0.0
  %1715 = vmatpush2.msra.mxu0 0.0
  %1716 = vmatprep.subr.mxu0 0.0
  %1717 = vmatpush2.msra.mxu0 0.0
  %1718 = vmatprep.subr.mxu0 0.0
  %1719 = vmatpush2.msra.mxu0 0.0
  %1720 = vmatprep.subr.mxu0 0.0
  %1721 = vmatpush2.msra.mxu0 0.0
  %1722 = vmatprep.subr.mxu0 0.0
  %1723 = vmatpush2.msra.mxu0 0.0
  %1724 = vmatprep.subr.mxu0 0.0
  %1725 = vmatpush2.msra.mxu0 0.0
  %1726 = vmatprep.subr.mxu0 0.0
  %1727 = vmatpush2.msra.mxu0 0.0
  %1728 = vmatprep.subr.mxu0 0.0
  %1729 = vmatpush2.msra.mxu0 0.0
  %1730 = vmatprep.mubr.f32.mxu0 0.0
  %1731 = vmatmul.mubr.f32.gmra.mxu0 %v1661
  %v1732 = vpop.f32.mrf.mxu0
  %v1733 = vadd.f32 %v51, %v1732
  %v1734 = vpop.f32.mrf.mxu0
  %1735 = vmatprep.mubr.f32.mxu0 0.0
  %1736 = vmatmul.mubr.f32.gmra.mxu0 %v1664
  %v1737 = vpop.f32.mrf.mxu0
  %v1738 = vadd.f32 %v51, %v1737
  %v1739 = vpop.f32.mrf.mxu0
  %1740 = vdwg.mxu0
  %1741 = vmatprep.subr.mxu0 0.0
  %1742 = vmatpush1.msra.mxu0 %v45
  %1743 = vmatprep.subr.mxu0 0.0
  %1744 = vmatpush1.msra.mxu0 %v44
  %1745 = vmatprep.subr.mxu0 0.0
  %1746 = vmatpush1.msra.mxu0 %v43
  %1747 = vmatprep.subr.mxu0 0.0
  %1748 = vmatpush1.msra.mxu0 %v42
  %1749 = vmatprep.subr.mxu0 0.0
  %1750 = vmatpush1.msra.mxu0 %v41
  %1751 = vmatprep.subr.mxu0 0.0
  %1752 = vmatpush1.msra.mxu0 %v40
  %1753 = vmatprep.subr.mxu0 0.0
  %1754 = vmatpush1.msra.mxu0 %v39
  %1755 = vmatprep.subr.mxu0 0.0
  %1756 = vmatpush1.msra.mxu0 %v38
  %1757 = vmatprep.subr.mxu0 0.0
  %1758 = vmatpush1.msra.mxu0 %v37
  %1759 = vmatprep.subr.mxu0 0.0
  %1760 = vmatpush1.msra.mxu0 %v36
  %1761 = vmatprep.subr.mxu0 0.0
  %1762 = vmatpush1.msra.mxu0 %v35
  %1763 = vmatprep.subr.mxu0 0.0
  %1764 = vmatpush1.msra.mxu0 %v34
  %1765 = vmatprep.subr.mxu0 0.0
  %1766 = vmatpush1.msra.mxu0 %v33
  %1767 = vmatprep.subr.mxu0 0.0
  %1768 = vmatpush1.msra.mxu0 %v32
  %1769 = vmatprep.subr.mxu0 0.0
  %1770 = vmatpush1.msra.mxu0 %v31
  %1771 = vmatprep.subr.mxu0 0.0
  %1772 = vmatpush1.msra.mxu0 %v30
  %1773 = vmatprep.subr.mxu0 0.0
  %1774 = vmatpush2.msra.mxu0 0.0
  %1775 = vmatprep.subr.mxu0 0.0
  %1776 = vmatpush2.msra.mxu0 0.0
  %1777 = vmatprep.subr.mxu0 0.0
  %1778 = vmatpush2.msra.mxu0 0.0
  %1779 = vmatprep.subr.mxu0 0.0
  %1780 = vmatpush2.msra.mxu0 0.0
  %1781 = vmatprep.subr.mxu0 0.0
  %1782 = vmatpush2.msra.mxu0 0.0
  %1783 = vmatprep.subr.mxu0 0.0
  %1784 = vmatpush2.msra.mxu0 0.0
  %1785 = vmatprep.subr.mxu0 0.0
  %1786 = vmatpush2.msra.mxu0 0.0
  %1787 = vmatprep.subr.mxu0 0.0
  %1788 = vmatpush2.msra.mxu0 0.0
  %1789 = vmatprep.subr.mxu0 0.0
  %1790 = vmatpush2.msra.mxu0 0.0
  %1791 = vmatprep.subr.mxu0 0.0
  %1792 = vmatpush2.msra.mxu0 0.0
  %1793 = vmatprep.subr.mxu0 0.0
  %1794 = vmatpush2.msra.mxu0 0.0
  %1795 = vmatprep.subr.mxu0 0.0
  %1796 = vmatpush2.msra.mxu0 0.0
  %1797 = vmatprep.subr.mxu0 0.0
  %1798 = vmatpush2.msra.mxu0 0.0
  %1799 = vmatprep.subr.mxu0 0.0
  %1800 = vmatpush2.msra.mxu0 0.0
  %1801 = vmatprep.subr.mxu0 0.0
  %1802 = vmatpush2.msra.mxu0 0.0
  %1803 = vmatprep.subr.mxu0 0.0
  %1804 = vmatpush2.msra.mxu0 0.0
  %1805 = vmatprep.mubr.f32.mxu0 0.0
  %1806 = vmatmul.mubr.f32.gmra.mxu0 %v1584
  %v1807 = vpop.f32.mrf.mxu0
  %v1808 = vadd.f32 0.0, %v1807
  %v1809 = vpop.f32.mrf.mxu0
  %1810 = vdwg.mxu0
  %v1811 = vadd.f32 %v1733, %v1808
  %v1812 = vtanh.pop %v1811
  %1813 = vmatprep.subr.mxu0 0.0
  %1814 = vmatpush1.msra.mxu0 %v45
  %1815 = vmatprep.subr.mxu0 0.0
  %1816 = vmatpush1.msra.mxu0 %v44
  %1817 = vmatprep.subr.mxu0 0.0
  %1818 = vmatpush1.msra.mxu0 %v43
  %1819 = vmatprep.subr.mxu0 0.0
  %1820 = vmatpush1.msra.mxu0 %v42
  %1821 = vmatprep.subr.mxu0 0.0
  %1822 = vmatpush1.msra.mxu0 %v41
  %1823 = vmatprep.subr.mxu0 0.0
  %1824 = vmatpush1.msra.mxu0 %v40
  %1825 = vmatprep.subr.mxu0 0.0
  %1826 = vmatpush1.msra.mxu0 %v39
  %1827 = vmatprep.subr.mxu0 0.0
  %1828 = vmatpush1.msra.mxu0 %v38
  %1829 = vmatprep.subr.mxu0 0.0
  %1830 = vmatpush1.msra.mxu0 %v37
  %1831 = vmatprep.subr.mxu0 0.0
  %1832 = vmatpush1.msra.mxu0 %v36
  %1833 = vmatprep.subr.mxu0 0.0
  %1834 = vmatpush1.msra.mxu0 %v35
  %1835 = vmatprep.subr.mxu0 0.0
  %1836 = vmatpush1.msra.mxu0 %v34
  %1837 = vmatprep.subr.mxu0 0.0
  %1838 = vmatpush1.msra.mxu0 %v33
  %1839 = vmatprep.subr.mxu0 0.0
  %1840 = vmatpush1.msra.mxu0 %v32
  %1841 = vmatprep.subr.mxu0 0.0
  %1842 = vmatpush1.msra.mxu0 %v31
  %1843 = vmatprep.subr.mxu0 0.0
  %1844 = vmatpush1.msra.mxu0 %v30
  %1845 = vmatprep.subr.mxu0 0.0
  %1846 = vmatpush2.msra.mxu0 0.0
  %1847 = vmatprep.subr.mxu0 0.0
  %1848 = vmatpush2.msra.mxu0 0.0
  %1849 = vmatprep.subr.mxu0 0.0
  %1850 = vmatpush2.msra.mxu0 0.0
  %1851 = vmatprep.subr.mxu0 0.0
  %1852 = vmatpush2.msra.mxu0 0.0
  %1853 = vmatprep.subr.mxu0 0.0
  %1854 = vmatpush2.msra.mxu0 0.0
  %1855 = vmatprep.subr.mxu0 0.0
  %1856 = vmatpush2.msra.mxu0 0.0
  %1857 = vmatprep.subr.mxu0 0.0
  %1858 = vmatpush2.msra.mxu0 0.0
  %1859 = vmatprep.subr.mxu0 0.0
  %1860 = vmatpush2.msra.mxu0 0.0
  %1861 = vmatprep.subr.mxu0 0.0
  %1862 = vmatpush2.msra.mxu0 0.0
  %1863 = vmatprep.subr.mxu0 0.0
  %1864 = vmatpush2.msra.mxu0 0.0
  %1865 = vmatprep.subr.mxu0 0.0
  %1866 = vmatpush2.msra.mxu0 0.0
  %1867 = vmatprep.subr.mxu0 0.0
  %1868 = vmatpush2.msra.mxu0 0.0
  %1869 = vmatprep.subr.mxu0 0.0
  %1870 = vmatpush2.msra.mxu0 0.0
  %1871 = vmatprep.subr.mxu0 0.0
  %1872 = vmatpush2.msra.mxu0 0.0
  %1873 = vmatprep.subr.mxu0 0.0
  %1874 = vmatpush2.msra.mxu0 0.0
  %1875 = vmatprep.subr.mxu0 0.0
  %1876 = vmatpush2.msra.mxu0 0.0
  %1877 = vmatprep.mubr.f32.mxu0 0.0
  %1878 = vmatmul.mubr.f32.gmra.mxu0 %v1656
  %v1879 = vpop.f32.mrf.mxu0
  %v1880 = vadd.f32 0.0, %v1879
  %v1881 = vpop.f32.mrf.mxu0
  %1882 = vdwg.mxu0
  %v1883 = vadd.f32 %v1738, %v1880
  %v1884 = vtanh.pop %v1883
  %1885 = vst [vmem:[#allocation2] sm:$0xff] %v1812
  %1886 = vst [vmem:[#allocation3] sm:$0xff] %v1884
  // Predicated region
  $region34: #{tpu_custom_call.1} parent=0 // pred_check
    %p1887 = pneg %p53
  $region35: #{tpu_custom_call.1} parent=0 // pred_check_branch
    %1889 = sbr.rel (%p1887) target = $region37
  $region36: #{tpu_custom_call.1} parent=0 // pred_region
    %v1890 = vld [vmem:[%s4] sm:$0x1]
    %v1892 = vlaneseq
    %v1893 = vshrl.u32 %v1892, 7
    %v1894 = vsub.s32 0, %v1893
    %v1895 = vrot.slane %v1890, %v1894
    %v1897 = vmul.f32 %v1812, %v1895
    %v1898 = vld [vmem:[%s5] sm:$0x1]
    %v1900 = vlaneseq
    %v1901 = vshrl.u32 %v1900, 7
    %v1902 = vsub.s32 0, %v1901
    %v1903 = vrot.slane %v1898, %v1902
    %v1905 = vmul.f32 %v1884, %v1903
    %v1906 = vadd.f32 %v1897, %v1905
    %1907 = vadd.xlane.f32.xlu0 %v1906
    %v1908 = vpop.xlane.xlu0 %1907
    %v1909 = vld [vmem:[#allocation4] sm:$0x1]
    %v1911 = vlaneseq
    %v1912 = vshrl.u32 %v1911, 7
    %v1913 = vsub.s32 0, %v1912
    %v1914 = vrot.slane %v1909, %v1913
    %v1916 = vadd.f32 %v1908, %v1914
    %v1917 = vxor.u32 %v1916, 2147483648
    %v1918 = vmul.f32 %v1917, 1.442695
    %v1919 = vpow.pop %v1918
    %v1920 = vadd.f32 %v1919, 1.0
    %v1921 = vrcp.pop %v1920
    %v1922 = vmul.f32 1.0, %v1921
    %vm1923 = vcmask 7168
    %1924 = vst.msk [vmem:[%s7] sm:$0xff] %vm1923, %v1922
  $region37: #{tpu_custom_call.1} parent=0 // pred_fallthru
    _
  // Predicated region
  $region38: #{tpu_custom_call.1} parent=0 // pred_check
    _
  $region39: #{tpu_custom_call.1} parent=0 // pred_check_branch
    %1926 = sbr.rel (0) target = $region41
  $region40: #{tpu_custom_call.1} parent=0 // pred_region
    _
  $region41: #{tpu_custom_call.1} parent=0 // pred_fallthru
    _
  // Predicated region
  $region42: #{tpu_custom_call.1} parent=0 // pred_check
    _
  $region43: #{tpu_custom_call.1} parent=0 // pred_check_branch
    %1928 = sbr.rel (0) target = $region45
  $region44: #{tpu_custom_call.1} parent=0 // pred_region
    _
  $region45: #{tpu_custom_call.1} parent=0 // pred_fallthru
    _

</llo_original>
